<compile_context>
chip_gen: v6e
topology: v6e:2x2x1
jax: 0.10.0
libtpu: 0.0.40
codegen_flags: <defaults>
</compile_context>

<pallas_src>
import math
from functools import partial

import jax
import jax.numpy as jnp
from jax import lax
from jax.experimental import pallas as pl
from jax.experimental.pallas import tpu as pltpu  # noqa: F401

# ---- model hyperparameters (small, consistent with the module) ----
D_MODEL = 32
N_HEAD = 4
DIM_FF = 64
NUM_LAYERS = 2
SEQ = 8
BATCH = 2
EPS = 1e-5  # norm1.eps == norm2.eps (PyTorch default)


def _layer_norm(x, w, b, eps):
    # torch.nn.LayerNorm over last dim, biased variance
    mu = jnp.mean(x, axis=-1, keepdims=True)
    xc = x - mu
    var = jnp.mean(xc * xc, axis=-1, keepdims=True)
    return xc * lax.rsqrt(var + eps) * w + b


def encoder_kernel(x_ref, w_big_ref, w_ffn_ref, vec_ref, out_ref, *,
                   n_head, batch, eps):
    """Entire TransformerEncoder (all layers, full batch) in one invocation.

    Rows of x_ref are the flattened (seq, batch) tokens in (S, B) order; the
    in-kernel additive bias blocks cross-batch attention.  Dropout is a no-op
    (eval semantics); mask=None / is_causal detected False.
    """
    N, E = x_ref.shape
    Dh = E // n_head
    n_layers = w_big_ref.shape[0]
    F = w_ffn_ref.shape[2]

    x = x_ref[...]                                            # (N, E)

    # cross-batch additive mask, generated in-kernel (no operand, no DMA)
    ri = lax.broadcasted_iota(jnp.int32, (N, N), 0)
    ci = lax.broadcasted_iota(jnp.int32, (N, N), 1)
    if batch & (batch - 1) == 0:                               # power of two
        same = (ri & (batch - 1)) == (ci & (batch - 1))
    else:
        same = (ri % batch) == (ci % batch)
    attn_bias = jnp.where(same, jnp.float32(0.0), jnp.float32(-1e30))  # (N, N)

    for l in range(n_layers):                                  # static unroll
        w_big = w_big_ref[l]           # (E, 2E+H*E): [Wq*scale | Wk | Wv_h@Wo_h ...]
        w_ffn = w_ffn_ref[l]           # (E+F, F):    [W1^T ; W2^T (lane-padded)]
        vec = vec_ref[l]               # (8, 2E+H*E): packed small params

        b_big = vec[0:1, :]            # fused qkv/vo bias (scale + Wo folded in)
        b_out = vec[1:2, 0:E]
        ln1_w = vec[2:3, 0:E]
        ln1_b = vec[3:4, 0:E]
        ln2_w = vec[4:5, 0:E]
        ln2_b = vec[5:6, 0:E]
        b1 = vec[6:7, 0:F]
        b2 = vec[7:8, 0:E]
        w1 = w_ffn[0:E, :]             # (E, F)
        w2 = w_ffn[E:E + F, 0:E]       # (F, E)

        # ---- fused Q / K / (V @ Wout per head) projection: one MXU push ----
        qkv = jnp.dot(x, w_big, preferred_element_type=jnp.float32) + b_big  # (N, 2E+H*E)

        # ---- multi-head self-attention (scale already folded into q cols) ----
        o = None
        for h in range(n_head):                                # static, H=4
            qh = qkv[:, h * Dh:(h + 1) * Dh]                   # (N, Dh)
            kh = qkv[:, E + h * Dh:E + (h + 1) * Dh]           # (N, Dh)
            vh = qkv[:, 2 * E + h * E:2 * E + (h + 1) * E]     # (N, E) == v_h @ Wo_h
            s = lax.dot_general(qh, kh, (((1,), (1,)), ((), ())),
                                preferred_element_type=jnp.float32)  # (N, N)
            s = s + attn_bias
            s = s - jnp.max(s, axis=-1, keepdims=True)
            p = jnp.exp(s)
            p = p * pl.reciprocal(jnp.sum(p, axis=-1, keepdims=True), approx=False)
            oh = jnp.dot(p, vh, preferred_element_type=jnp.float32)  # (N, E) lane-dense
            o = oh if o is None else o + oh
        attn = o + b_out                                       # (N, E)

        # ---- residual + LayerNorm 1 (norm_first=False => post-norm) ----
        y = _layer_norm(x + attn, ln1_w, ln1_b, eps)

        # ---- feed-forward: linear1 -> ReLU -> linear2 ----
        hmid = jnp.maximum(jnp.dot(y, w1, preferred_element_type=jnp.float32) + b1, 0.0)
        ff = jnp.dot(hmid, w2, preferred_element_type=jnp.float32) + b2

        # ---- residual + LayerNorm 2 ----
        x = _layer_norm(y + ff, ln2_w, ln2_b, eps)

    out_ref[...] = x


def _full_spec(shape):
    nd = len(shape)
    return pl.BlockSpec(shape, lambda *_: (0,) * nd)


def pack_params(params):
    """One-time host-side repack (call ONCE at setup, not per forward):
    fuse QKV + per-head out-projection into one weight slab per layer, fold the
    1/sqrt(Dh) softmax scale into the q columns/bias, stack the FFN weights
    into one slab, and collect every small 1-D parameter into a single
    lane-aligned (8, 2E+H*E) slab per layer."""
    H = N_HEAD
    w_big_l, w_ffn_l, vec_l = [], [], []
    for (w_in, b_in, w_out, b_out, ln1_w, ln1_b, ln2_w, ln2_b,
         w1, b1, w2, b2) in params:
        E = w_out.shape[0]
        Dh = E // H
        F = w1.shape[0]           # requires F >= E for the FFN slab padding
        wide = 2 * E + H * E
        scale = 1.0 / math.sqrt(Dh)

        wo_t = w_out.T                                           # (E, E)
        cols = [w_in[0:E, :].T * scale, w_in[E:2 * E, :].T]      # q (scaled), k
        bias_cols = [b_in[0:E] * scale, b_in[E:2 * E]]
        for h in range(H):
            wv_h_t = w_in[2 * E + h * Dh:2 * E + (h + 1) * Dh, :].T   # (E, Dh)
            wo_h = wo_t[h * Dh:(h + 1) * Dh, :]                       # (Dh, E)
            cols.append(wv_h_t @ wo_h)                                # (E, E)
            bias_cols.append(b_in[2 * E + h * Dh:2 * E + (h + 1) * Dh] @ wo_h)
        w_big_l.append(jnp.concatenate(cols, axis=1))                 # (E, wide)

        w_ffn_l.append(jnp.concatenate(
            [w1.T, jnp.pad(w2.T, ((0, 0), (0, F - E)))], axis=0))     # (E+F, F)

        def row(u):
            u = jnp.asarray(u, jnp.float32).reshape(1, -1)
            return jnp.pad(u, ((0, 0), (0, wide - u.shape[1])))
        vec_l.append(jnp.concatenate(
            [row(jnp.concatenate(bias_cols)), row(b_out), row(ln1_w), row(ln1_b),
             row(ln2_w), row(ln2_b), row(b1), row(b2)], axis=0))      # (8, wide)

    return (jnp.stack(w_big_l), jnp.stack(w_ffn_l), jnp.stack(vec_l))


@jax.jit
def transformer_encoder(src_sbe, packed):
    """src_sbe: (S, B, E) — PyTorch default seq-first layout (batch_first=False).
    norm=None, mask=None, src_key_padding_mask=None, eval mode.
    `packed` = pack_params(params), computed once outside the call path."""
    S, B, E = src_sbe.shape
    N = S * B
    x = src_sbe.reshape(N, E)        # row n <-> (seq n//B, batch n%B); free reshape
    w_big, w_ffn, vec = packed

    kern = partial(encoder_kernel, n_head=N_HEAD, batch=B, eps=EPS)
    out = pl.pallas_call(
        kern,
        out_shape=jax.ShapeDtypeStruct((N, E), jnp.float32),
        in_specs=[_full_spec(x.shape), _full_spec(w_big.shape),
                  _full_spec(w_ffn.shape), _full_spec(vec.shape)],
        out_specs=_full_spec((N, E)),
    )(x, w_big, w_ffn, vec)
    # TODO(synk): torch._nested_tensor_from_mask fast path (padding-mask nested
    # tensors) has no Pallas equivalent; perf-only and not taken here
    # (src_key_padding_mask=None).
    return out.reshape(S, B, E)


def init_params(key, num_layers, d_model, dim_ff):
    params = []
    for _ in range(num_layers):
        key, k0, k1, k2, k3 = jax.random.split(key, 5)
        w_in = 0.02 * jax.random.normal(k0, (3 * d_model, d_model), jnp.float32)
        b_in = jnp.zeros((3 * d_model,), jnp.float32)
        w_out = 0.02 * jax.random.normal(k1, (d_model, d_model), jnp.float32)
        b_out = jnp.zeros((d_model,), jnp.float32)
        ln1_w = jnp.ones((d_model,), jnp.float32)
        ln1_b = jnp.zeros((d_model,), jnp.float32)
        ln2_w = jnp.ones((d_model,), jnp.float32)
        ln2_b = jnp.zeros((d_model,), jnp.float32)
        w1 = 0.02 * jax.random.normal(k2, (dim_ff, d_model), jnp.float32)
        b1 = jnp.zeros((dim_ff,), jnp.float32)
        w2 = 0.02 * jax.random.normal(k3, (d_model, dim_ff), jnp.float32)
        b2 = jnp.zeros((d_model,), jnp.float32)
        params.append((w_in, b_in, w_out, b_out, ln1_w, ln1_b, ln2_w, ln2_b,
                       w1, b1, w2, b2))
    return params


if __name__ == "__main__":
    key = jax.random.PRNGKey(0)
    k_src, k_par = jax.random.split(key)
    src = jax.random.normal(k_src, (SEQ, BATCH, D_MODEL), jnp.float32)  # (S, B, E)
    params = init_params(k_par, NUM_LAYERS, D_MODEL, DIM_FF)

    packed = pack_params(params)          # one-time repack, hoisted out of call path
    out = transformer_encoder(src, packed)
    out = jax.block_until_ready(out)
    assert out.shape == (SEQ, BATCH, D_MODEL)
    assert bool(jnp.all(jnp.isfinite(out)))
    print("KERNEL_OK")
</pallas_src>

<mosaic_0001>
module attributes {stable_mosaic.version = 11 : i64} {
  func.func @encoder_kernel(%arg0: memref<16x32xf32, #tpu.memory_space<vmem>>, %arg1: memref<2x32x192xf32, #tpu.memory_space<vmem>>, %arg2: memref<2x96x64xf32, #tpu.memory_space<vmem>>, %arg3: memref<2x8x192xf32, #tpu.memory_space<vmem>>, %arg4: memref<16x32xf32, #tpu.memory_space<vmem>>) attributes {dimension_semantics = [], scalar_prefetch = 0 : i64, scratch_operands = 0 : i64, tpu.core_type = #tpu.core_type<tc>} {
    %c0 = arith.constant 0 : index
    %c0_0 = arith.constant 0 : index
    %0 = vector.load %arg0[%c0, %c0_0] : memref<16x32xf32, #tpu.memory_space<vmem>>, vector<16x32xf32>
    %1 = tpu.iota {dimensions = array<i32: 0>} : vector<16x16xi32>
    %2 = tpu.iota {dimensions = array<i32: 1>} : vector<16x16xi32>
    %c1_i32 = arith.constant 1 : i32
    %3 = vector.broadcast %c1_i32 : i32 to vector<16x16xi32>
    %4 = arith.andi %1, %3 : vector<16x16xi32>
    %c1_i32_1 = arith.constant 1 : i32
    %5 = vector.broadcast %c1_i32_1 : i32 to vector<16x16xi32>
    %6 = arith.andi %2, %5 : vector<16x16xi32>
    %7 = arith.cmpi eq, %4, %6 : vector<16x16xi32>
    %cst = arith.constant 0.000000e+00 : f32
    %cst_2 = arith.constant -1.000000e+30 : f32
    %8 = vector.broadcast %cst : f32 to vector<16x16xf32>
    %9 = vector.broadcast %cst_2 : f32 to vector<16x16xf32>
    %10 = arith.select %7, %8, %9 : vector<16x16xi1>, vector<16x16xf32>
    %c0_3 = arith.constant 0 : index
    %c0_4 = arith.constant 0 : index
    %c0_5 = arith.constant 0 : index
    %11 = vector.load %arg1[%c0_3, %c0_4, %c0_5] : memref<2x32x192xf32, #tpu.memory_space<vmem>>, vector<1x32x192xf32>
    %12 = vector.shape_cast %11 : vector<1x32x192xf32> to vector<32x192xf32>
    %c0_6 = arith.constant 0 : index
    %c0_7 = arith.constant 0 : index
    %c0_8 = arith.constant 0 : index
    %13 = vector.load %arg2[%c0_6, %c0_7, %c0_8] : memref<2x96x64xf32, #tpu.memory_space<vmem>>, vector<1x96x64xf32>
    %14 = vector.shape_cast %13 : vector<1x96x64xf32> to vector<96x64xf32>
    %c0_9 = arith.constant 0 : index
    %c0_10 = arith.constant 0 : index
    %c0_11 = arith.constant 0 : index
    %15 = vector.load %arg3[%c0_9, %c0_10, %c0_11] : memref<2x8x192xf32, #tpu.memory_space<vmem>>, vector<1x8x192xf32>
    %16 = vector.shape_cast %15 : vector<1x8x192xf32> to vector<8x192xf32>
    %17 = vector.extract_strided_slice %16 {offsets = [0, 0], sizes = [1, 192], strides = [1, 1]} : vector<8x192xf32> to vector<1x192xf32>
    %18 = vector.extract_strided_slice %16 {offsets = [1, 0], sizes = [1, 32], strides = [1, 1]} : vector<8x192xf32> to vector<1x32xf32>
    %19 = vector.extract_strided_slice %16 {offsets = [2, 0], sizes = [1, 32], strides = [1, 1]} : vector<8x192xf32> to vector<1x32xf32>
    %20 = vector.extract_strided_slice %16 {offsets = [3, 0], sizes = [1, 32], strides = [1, 1]} : vector<8x192xf32> to vector<1x32xf32>
    %21 = vector.extract_strided_slice %16 {offsets = [4, 0], sizes = [1, 32], strides = [1, 1]} : vector<8x192xf32> to vector<1x32xf32>
    %22 = vector.extract_strided_slice %16 {offsets = [5, 0], sizes = [1, 32], strides = [1, 1]} : vector<8x192xf32> to vector<1x32xf32>
    %23 = vector.extract_strided_slice %16 {offsets = [6, 0], sizes = [1, 64], strides = [1, 1]} : vector<8x192xf32> to vector<1x64xf32>
    %24 = vector.extract_strided_slice %16 {offsets = [7, 0], sizes = [1, 32], strides = [1, 1]} : vector<8x192xf32> to vector<1x32xf32>
    %25 = vector.extract_strided_slice %14 {offsets = [0, 0], sizes = [32, 64], strides = [1, 1]} : vector<96x64xf32> to vector<32x64xf32>
    %26 = vector.extract_strided_slice %14 {offsets = [32, 0], sizes = [64, 32], strides = [1, 1]} : vector<96x64xf32> to vector<64x32xf32>
    %cst_12 = arith.constant dense<0.000000e+00> : vector<16x192xf32>
    %27 = tpu.matmul %0, %12, %cst_12 {dimension_numbers = #tpu.dot_dimension_numbers<[1], [0], [0], [1], [0, 0, 1, 1], [], []>} : vector<16x32xf32>, vector<32x192xf32>, vector<16x192xf32> -> vector<16x192xf32>
    %28 = vector.broadcast %17 : vector<1x192xf32> to vector<16x192xf32>
    %29 = arith.addf %27, %28 : vector<16x192xf32>
    %30 = vector.extract_strided_slice %29 {offsets = [0, 0], sizes = [16, 8], strides = [1, 1]} : vector<16x192xf32> to vector<16x8xf32>
    %31 = vector.extract_strided_slice %29 {offsets = [0, 32], sizes = [16, 8], strides = [1, 1]} : vector<16x192xf32> to vector<16x8xf32>
    %32 = vector.extract_strided_slice %29 {offsets = [0, 64], sizes = [16, 32], strides = [1, 1]} : vector<16x192xf32> to vector<16x32xf32>
    %cst_13 = arith.constant dense<0.000000e+00> : vector<16x16xf32>
    %33 = tpu.matmul %30, %31, %cst_13 {dimension_numbers = #tpu.dot_dimension_numbers<[1], [1], [0], [0], [0, 0, 1, 0], [], []>} : vector<16x8xf32>, vector<16x8xf32>, vector<16x16xf32> -> vector<16x16xf32>
    %34 = arith.addf %33, %10 : vector<16x16xf32>
    %cst_14 = arith.constant dense<0xFF800000> : vector<16xf32>
    %35 = vector.multi_reduction <maximumf>, %34, %cst_14 [1] : vector<16x16xf32> to vector<16xf32>
    %36 = vector.shape_cast %35 : vector<16xf32> to vector<16x1xf32>
    %37 = vector.broadcast %36 : vector<16x1xf32> to vector<16x16xf32>
    %38 = arith.subf %34, %37 : vector<16x16xf32>
    %39 = math.exp %38 : vector<16x16xf32>
    %cst_15 = arith.constant dense<0.000000e+00> : vector<16xf32>
    %40 = vector.multi_reduction <add>, %39, %cst_15 [1] : vector<16x16xf32> to vector<16xf32>
    %41 = vector.shape_cast %40 : vector<16xf32> to vector<16x1xf32>
    %42 = tpu.reciprocal %41 : vector<16x1xf32> -> vector<16x1xf32>
    %43 = vector.broadcast %42 : vector<16x1xf32> to vector<16x16xf32>
    %44 = arith.mulf %39, %43 : vector<16x16xf32>
    %cst_16 = arith.constant dense<0.000000e+00> : vector<16x32xf32>
    %45 = tpu.matmul %44, %32, %cst_16 {dimension_numbers = #tpu.dot_dimension_numbers<[1], [0], [0], [1], [0, 0, 1, 1], [], []>} : vector<16x16xf32>, vector<16x32xf32>, vector<16x32xf32> -> vector<16x32xf32>
    %46 = vector.extract_strided_slice %29 {offsets = [0, 8], sizes = [16, 8], strides = [1, 1]} : vector<16x192xf32> to vector<16x8xf32>
    %47 = vector.extract_strided_slice %29 {offsets = [0, 40], sizes = [16, 8], strides = [1, 1]} : vector<16x192xf32> to vector<16x8xf32>
    %48 = vector.extract_strided_slice %29 {offsets = [0, 96], sizes = [16, 32], strides = [1, 1]} : vector<16x192xf32> to vector<16x32xf32>
    %cst_17 = arith.constant dense<0.000000e+00> : vector<16x16xf32>
    %49 = tpu.matmul %46, %47, %cst_17 {dimension_numbers = #tpu.dot_dimension_numbers<[1], [1], [0], [0], [0, 0, 1, 0], [], []>} : vector<16x8xf32>, vector<16x8xf32>, vector<16x16xf32> -> vector<16x16xf32>
    %50 = arith.addf %49, %10 : vector<16x16xf32>
    %cst_18 = arith.constant dense<0xFF800000> : vector<16xf32>
    %51 = vector.multi_reduction <maximumf>, %50, %cst_18 [1] : vector<16x16xf32> to vector<16xf32>
    %52 = vector.shape_cast %51 : vector<16xf32> to vector<16x1xf32>
    %53 = vector.broadcast %52 : vector<16x1xf32> to vector<16x16xf32>
    %54 = arith.subf %50, %53 : vector<16x16xf32>
    %55 = math.exp %54 : vector<16x16xf32>
    %cst_19 = arith.constant dense<0.000000e+00> : vector<16xf32>
    %56 = vector.multi_reduction <add>, %55, %cst_19 [1] : vector<16x16xf32> to vector<16xf32>
    %57 = vector.shape_cast %56 : vector<16xf32> to vector<16x1xf32>
    %58 = tpu.reciprocal %57 : vector<16x1xf32> -> vector<16x1xf32>
    %59 = vector.broadcast %58 : vector<16x1xf32> to vector<16x16xf32>
    %60 = arith.mulf %55, %59 : vector<16x16xf32>
    %cst_20 = arith.constant dense<0.000000e+00> : vector<16x32xf32>
    %61 = tpu.matmul %60, %48, %cst_20 {dimension_numbers = #tpu.dot_dimension_numbers<[1], [0], [0], [1], [0, 0, 1, 1], [], []>} : vector<16x16xf32>, vector<16x32xf32>, vector<16x32xf32> -> vector<16x32xf32>
    %62 = arith.addf %45, %61 : vector<16x32xf32>
    %63 = vector.extract_strided_slice %29 {offsets = [0, 16], sizes = [16, 8], strides = [1, 1]} : vector<16x192xf32> to vector<16x8xf32>
    %64 = vector.extract_strided_slice %29 {offsets = [0, 48], sizes = [16, 8], strides = [1, 1]} : vector<16x192xf32> to vector<16x8xf32>
    %65 = vector.extract_strided_slice %29 {offsets = [0, 128], sizes = [16, 32], strides = [1, 1]} : vector<16x192xf32> to vector<16x32xf32>
    %cst_21 = arith.constant dense<0.000000e+00> : vector<16x16xf32>
    %66 = tpu.matmul %63, %64, %cst_21 {dimension_numbers = #tpu.dot_dimension_numbers<[1], [1], [0], [0], [0, 0, 1, 0], [], []>} : vector<16x8xf32>, vector<16x8xf32>, vector<16x16xf32> -> vector<16x16xf32>
    %67 = arith.addf %66, %10 : vector<16x16xf32>
    %cst_22 = arith.constant dense<0xFF800000> : vector<16xf32>
    %68 = vector.multi_reduction <maximumf>, %67, %cst_22 [1] : vector<16x16xf32> to vector<16xf32>
    %69 = vector.shape_cast %68 : vector<16xf32> to vector<16x1xf32>
    %70 = vector.broadcast %69 : vector<16x1xf32> to vector<16x16xf32>
    %71 = arith.subf %67, %70 : vector<16x16xf32>
    %72 = math.exp %71 : vector<16x16xf32>
    %cst_23 = arith.constant dense<0.000000e+00> : vector<16xf32>
    %73 = vector.multi_reduction <add>, %72, %cst_23 [1] : vector<16x16xf32> to vector<16xf32>
    %74 = vector.shape_cast %73 : vector<16xf32> to vector<16x1xf32>
    %75 = tpu.reciprocal %74 : vector<16x1xf32> -> vector<16x1xf32>
    %76 = vector.broadcast %75 : vector<16x1xf32> to vector<16x16xf32>
    %77 = arith.mulf %72, %76 : vector<16x16xf32>
    %cst_24 = arith.constant dense<0.000000e+00> : vector<16x32xf32>
    %78 = tpu.matmul %77, %65, %cst_24 {dimension_numbers = #tpu.dot_dimension_numbers<[1], [0], [0], [1], [0, 0, 1, 1], [], []>} : vector<16x16xf32>, vector<16x32xf32>, vector<16x32xf32> -> vector<16x32xf32>
    %79 = arith.addf %62, %78 : vector<16x32xf32>
    %80 = vector.extract_strided_slice %29 {offsets = [0, 24], sizes = [16, 8], strides = [1, 1]} : vector<16x192xf32> to vector<16x8xf32>
    %81 = vector.extract_strided_slice %29 {offsets = [0, 56], sizes = [16, 8], strides = [1, 1]} : vector<16x192xf32> to vector<16x8xf32>
    %82 = vector.extract_strided_slice %29 {offsets = [0, 160], sizes = [16, 32], strides = [1, 1]} : vector<16x192xf32> to vector<16x32xf32>
    %cst_25 = arith.constant dense<0.000000e+00> : vector<16x16xf32>
    %83 = tpu.matmul %80, %81, %cst_25 {dimension_numbers = #tpu.dot_dimension_numbers<[1], [1], [0], [0], [0, 0, 1, 0], [], []>} : vector<16x8xf32>, vector<16x8xf32>, vector<16x16xf32> -> vector<16x16xf32>
    %84 = arith.addf %83, %10 : vector<16x16xf32>
    %cst_26 = arith.constant dense<0xFF800000> : vector<16xf32>
    %85 = vector.multi_reduction <maximumf>, %84, %cst_26 [1] : vector<16x16xf32> to vector<16xf32>
    %86 = vector.shape_cast %85 : vector<16xf32> to vector<16x1xf32>
    %87 = vector.broadcast %86 : vector<16x1xf32> to vector<16x16xf32>
    %88 = arith.subf %84, %87 : vector<16x16xf32>
    %89 = math.exp %88 : vector<16x16xf32>
    %cst_27 = arith.constant dense<0.000000e+00> : vector<16xf32>
    %90 = vector.multi_reduction <add>, %89, %cst_27 [1] : vector<16x16xf32> to vector<16xf32>
    %91 = vector.shape_cast %90 : vector<16xf32> to vector<16x1xf32>
    %92 = tpu.reciprocal %91 : vector<16x1xf32> -> vector<16x1xf32>
    %93 = vector.broadcast %92 : vector<16x1xf32> to vector<16x16xf32>
    %94 = arith.mulf %89, %93 : vector<16x16xf32>
    %cst_28 = arith.constant dense<0.000000e+00> : vector<16x32xf32>
    %95 = tpu.matmul %94, %82, %cst_28 {dimension_numbers = #tpu.dot_dimension_numbers<[1], [0], [0], [1], [0, 0, 1, 1], [], []>} : vector<16x16xf32>, vector<16x32xf32>, vector<16x32xf32> -> vector<16x32xf32>
    %96 = arith.addf %79, %95 : vector<16x32xf32>
    %97 = vector.broadcast %18 : vector<1x32xf32> to vector<16x32xf32>
    %98 = arith.addf %96, %97 : vector<16x32xf32>
    %99 = arith.addf %0, %98 : vector<16x32xf32>
    %cst_29 = arith.constant dense<0.000000e+00> : vector<16xf32>
    %100 = vector.multi_reduction <add>, %99, %cst_29 [1] : vector<16x32xf32> to vector<16xf32>
    %101 = vector.shape_cast %100 : vector<16xf32> to vector<16x1xf32>
    %cst_30 = arith.constant 3.200000e+01 : f32
    %102 = vector.broadcast %cst_30 : f32 to vector<16x1xf32>
    %103 = arith.divf %101, %102 : vector<16x1xf32>
    %104 = vector.broadcast %103 : vector<16x1xf32> to vector<16x32xf32>
    %105 = arith.subf %99, %104 : vector<16x32xf32>
    %106 = arith.mulf %105, %105 : vector<16x32xf32>
    %cst_31 = arith.constant dense<0.000000e+00> : vector<16xf32>
    %107 = vector.multi_reduction <add>, %106, %cst_31 [1] : vector<16x32xf32> to vector<16xf32>
    %108 = vector.shape_cast %107 : vector<16xf32> to vector<16x1xf32>
    %cst_32 = arith.constant 3.200000e+01 : f32
    %109 = vector.broadcast %cst_32 : f32 to vector<16x1xf32>
    %110 = arith.divf %108, %109 : vector<16x1xf32>
    %cst_33 = arith.constant 9.99999974E-6 : f32
    %111 = vector.broadcast %cst_33 : f32 to vector<16x1xf32>
    %112 = arith.addf %110, %111 : vector<16x1xf32>
    %113 = math.rsqrt %112 : vector<16x1xf32>
    %114 = vector.broadcast %113 : vector<16x1xf32> to vector<16x32xf32>
    %115 = arith.mulf %105, %114 : vector<16x32xf32>
    %116 = vector.broadcast %19 : vector<1x32xf32> to vector<16x32xf32>
    %117 = arith.mulf %115, %116 : vector<16x32xf32>
    %118 = vector.broadcast %20 : vector<1x32xf32> to vector<16x32xf32>
    %119 = arith.addf %117, %118 : vector<16x32xf32>
    %cst_34 = arith.constant dense<0.000000e+00> : vector<16x64xf32>
    %120 = tpu.matmul %119, %25, %cst_34 {dimension_numbers = #tpu.dot_dimension_numbers<[1], [0], [0], [1], [0, 0, 1, 1], [], []>} : vector<16x32xf32>, vector<32x64xf32>, vector<16x64xf32> -> vector<16x64xf32>
    %121 = vector.broadcast %23 : vector<1x64xf32> to vector<16x64xf32>
    %122 = arith.addf %120, %121 : vector<16x64xf32>
    %cst_35 = arith.constant 0.000000e+00 : f32
    %123 = vector.broadcast %cst_35 : f32 to vector<16x64xf32>
    %124 = arith.maximumf %122, %123 : vector<16x64xf32>
    %cst_36 = arith.constant dense<0.000000e+00> : vector<16x32xf32>
    %125 = tpu.matmul %124, %26, %cst_36 {dimension_numbers = #tpu.dot_dimension_numbers<[1], [0], [0], [1], [0, 0, 1, 1], [], []>} : vector<16x64xf32>, vector<64x32xf32>, vector<16x32xf32> -> vector<16x32xf32>
    %126 = vector.broadcast %24 : vector<1x32xf32> to vector<16x32xf32>
    %127 = arith.addf %125, %126 : vector<16x32xf32>
    %128 = arith.addf %119, %127 : vector<16x32xf32>
    %cst_37 = arith.constant dense<0.000000e+00> : vector<16xf32>
    %129 = vector.multi_reduction <add>, %128, %cst_37 [1] : vector<16x32xf32> to vector<16xf32>
    %130 = vector.shape_cast %129 : vector<16xf32> to vector<16x1xf32>
    %cst_38 = arith.constant 3.200000e+01 : f32
    %131 = vector.broadcast %cst_38 : f32 to vector<16x1xf32>
    %132 = arith.divf %130, %131 : vector<16x1xf32>
    %133 = vector.broadcast %132 : vector<16x1xf32> to vector<16x32xf32>
    %134 = arith.subf %128, %133 : vector<16x32xf32>
    %135 = arith.mulf %134, %134 : vector<16x32xf32>
    %cst_39 = arith.constant dense<0.000000e+00> : vector<16xf32>
    %136 = vector.multi_reduction <add>, %135, %cst_39 [1] : vector<16x32xf32> to vector<16xf32>
    %137 = vector.shape_cast %136 : vector<16xf32> to vector<16x1xf32>
    %cst_40 = arith.constant 3.200000e+01 : f32
    %138 = vector.broadcast %cst_40 : f32 to vector<16x1xf32>
    %139 = arith.divf %137, %138 : vector<16x1xf32>
    %cst_41 = arith.constant 9.99999974E-6 : f32
    %140 = vector.broadcast %cst_41 : f32 to vector<16x1xf32>
    %141 = arith.addf %139, %140 : vector<16x1xf32>
    %142 = math.rsqrt %141 : vector<16x1xf32>
    %143 = vector.broadcast %142 : vector<16x1xf32> to vector<16x32xf32>
    %144 = arith.mulf %134, %143 : vector<16x32xf32>
    %145 = vector.broadcast %21 : vector<1x32xf32> to vector<16x32xf32>
    %146 = arith.mulf %144, %145 : vector<16x32xf32>
    %147 = vector.broadcast %22 : vector<1x32xf32> to vector<16x32xf32>
    %148 = arith.addf %146, %147 : vector<16x32xf32>
    %c1 = arith.constant 1 : index
    %c0_42 = arith.constant 0 : index
    %c0_43 = arith.constant 0 : index
    %149 = vector.load %arg1[%c1, %c0_42, %c0_43] : memref<2x32x192xf32, #tpu.memory_space<vmem>>, vector<1x32x192xf32>
    %150 = vector.shape_cast %149 : vector<1x32x192xf32> to vector<32x192xf32>
    %c1_44 = arith.constant 1 : index
    %c0_45 = arith.constant 0 : index
    %c0_46 = arith.constant 0 : index
    %151 = vector.load %arg2[%c1_44, %c0_45, %c0_46] : memref<2x96x64xf32, #tpu.memory_space<vmem>>, vector<1x96x64xf32>
    %152 = vector.shape_cast %151 : vector<1x96x64xf32> to vector<96x64xf32>
    %c1_47 = arith.constant 1 : index
    %c0_48 = arith.constant 0 : index
    %c0_49 = arith.constant 0 : index
    %153 = vector.load %arg3[%c1_47, %c0_48, %c0_49] : memref<2x8x192xf32, #tpu.memory_space<vmem>>, vector<1x8x192xf32>
    %154 = vector.shape_cast %153 : vector<1x8x192xf32> to vector<8x192xf32>
    %155 = vector.extract_strided_slice %154 {offsets = [0, 0], sizes = [1, 192], strides = [1, 1]} : vector<8x192xf32> to vector<1x192xf32>
    %156 = vector.extract_strided_slice %154 {offsets = [1, 0], sizes = [1, 32], strides = [1, 1]} : vector<8x192xf32> to vector<1x32xf32>
    %157 = vector.extract_strided_slice %154 {offsets = [2, 0], sizes = [1, 32], strides = [1, 1]} : vector<8x192xf32> to vector<1x32xf32>
    %158 = vector.extract_strided_slice %154 {offsets = [3, 0], sizes = [1, 32], strides = [1, 1]} : vector<8x192xf32> to vector<1x32xf32>
    %159 = vector.extract_strided_slice %154 {offsets = [4, 0], sizes = [1, 32], strides = [1, 1]} : vector<8x192xf32> to vector<1x32xf32>
    %160 = vector.extract_strided_slice %154 {offsets = [5, 0], sizes = [1, 32], strides = [1, 1]} : vector<8x192xf32> to vector<1x32xf32>
    %161 = vector.extract_strided_slice %154 {offsets = [6, 0], sizes = [1, 64], strides = [1, 1]} : vector<8x192xf32> to vector<1x64xf32>
    %162 = vector.extract_strided_slice %154 {offsets = [7, 0], sizes = [1, 32], strides = [1, 1]} : vector<8x192xf32> to vector<1x32xf32>
    %163 = vector.extract_strided_slice %152 {offsets = [0, 0], sizes = [32, 64], strides = [1, 1]} : vector<96x64xf32> to vector<32x64xf32>
    %164 = vector.extract_strided_slice %152 {offsets = [32, 0], sizes = [64, 32], strides = [1, 1]} : vector<96x64xf32> to vector<64x32xf32>
    %cst_50 = arith.constant dense<0.000000e+00> : vector<16x192xf32>
    %165 = tpu.matmul %148, %150, %cst_50 {dimension_numbers = #tpu.dot_dimension_numbers<[1], [0], [0], [1], [0, 0, 1, 1], [], []>} : vector<16x32xf32>, vector<32x192xf32>, vector<16x192xf32> -> vector<16x192xf32>
    %166 = vector.broadcast %155 : vector<1x192xf32> to vector<16x192xf32>
    %167 = arith.addf %165, %166 : vector<16x192xf32>
    %168 = vector.extract_strided_slice %167 {offsets = [0, 0], sizes = [16, 8], strides = [1, 1]} : vector<16x192xf32> to vector<16x8xf32>
    %169 = vector.extract_strided_slice %167 {offsets = [0, 32], sizes = [16, 8], strides = [1, 1]} : vector<16x192xf32> to vector<16x8xf32>
    %170 = vector.extract_strided_slice %167 {offsets = [0, 64], sizes = [16, 32], strides = [1, 1]} : vector<16x192xf32> to vector<16x32xf32>
    %cst_51 = arith.constant dense<0.000000e+00> : vector<16x16xf32>
    %171 = tpu.matmul %168, %169, %cst_51 {dimension_numbers = #tpu.dot_dimension_numbers<[1], [1], [0], [0], [0, 0, 1, 0], [], []>} : vector<16x8xf32>, vector<16x8xf32>, vector<16x16xf32> -> vector<16x16xf32>
    %172 = arith.addf %171, %10 : vector<16x16xf32>
    %cst_52 = arith.constant dense<0xFF800000> : vector<16xf32>
    %173 = vector.multi_reduction <maximumf>, %172, %cst_52 [1] : vector<16x16xf32> to vector<16xf32>
    %174 = vector.shape_cast %173 : vector<16xf32> to vector<16x1xf32>
    %175 = vector.broadcast %174 : vector<16x1xf32> to vector<16x16xf32>
    %176 = arith.subf %172, %175 : vector<16x16xf32>
    %177 = math.exp %176 : vector<16x16xf32>
    %cst_53 = arith.constant dense<0.000000e+00> : vector<16xf32>
    %178 = vector.multi_reduction <add>, %177, %cst_53 [1] : vector<16x16xf32> to vector<16xf32>
    %179 = vector.shape_cast %178 : vector<16xf32> to vector<16x1xf32>
    %180 = tpu.reciprocal %179 : vector<16x1xf32> -> vector<16x1xf32>
    %181 = vector.broadcast %180 : vector<16x1xf32> to vector<16x16xf32>
    %182 = arith.mulf %177, %181 : vector<16x16xf32>
    %cst_54 = arith.constant dense<0.000000e+00> : vector<16x32xf32>
    %183 = tpu.matmul %182, %170, %cst_54 {dimension_numbers = #tpu.dot_dimension_numbers<[1], [0], [0], [1], [0, 0, 1, 1], [], []>} : vector<16x16xf32>, vector<16x32xf32>, vector<16x32xf32> -> vector<16x32xf32>
    %184 = vector.extract_strided_slice %167 {offsets = [0, 8], sizes = [16, 8], strides = [1, 1]} : vector<16x192xf32> to vector<16x8xf32>
    %185 = vector.extract_strided_slice %167 {offsets = [0, 40], sizes = [16, 8], strides = [1, 1]} : vector<16x192xf32> to vector<16x8xf32>
    %186 = vector.extract_strided_slice %167 {offsets = [0, 96], sizes = [16, 32], strides = [1, 1]} : vector<16x192xf32> to vector<16x32xf32>
    %cst_55 = arith.constant dense<0.000000e+00> : vector<16x16xf32>
    %187 = tpu.matmul %184, %185, %cst_55 {dimension_numbers = #tpu.dot_dimension_numbers<[1], [1], [0], [0], [0, 0, 1, 0], [], []>} : vector<16x8xf32>, vector<16x8xf32>, vector<16x16xf32> -> vector<16x16xf32>
    %188 = arith.addf %187, %10 : vector<16x16xf32>
    %cst_56 = arith.constant dense<0xFF800000> : vector<16xf32>
    %189 = vector.multi_reduction <maximumf>, %188, %cst_56 [1] : vector<16x16xf32> to vector<16xf32>
    %190 = vector.shape_cast %189 : vector<16xf32> to vector<16x1xf32>
    %191 = vector.broadcast %190 : vector<16x1xf32> to vector<16x16xf32>
    %192 = arith.subf %188, %191 : vector<16x16xf32>
    %193 = math.exp %192 : vector<16x16xf32>
    %cst_57 = arith.constant dense<0.000000e+00> : vector<16xf32>
    %194 = vector.multi_reduction <add>, %193, %cst_57 [1] : vector<16x16xf32> to vector<16xf32>
    %195 = vector.shape_cast %194 : vector<16xf32> to vector<16x1xf32>
    %196 = tpu.reciprocal %195 : vector<16x1xf32> -> vector<16x1xf32>
    %197 = vector.broadcast %196 : vector<16x1xf32> to vector<16x16xf32>
    %198 = arith.mulf %193, %197 : vector<16x16xf32>
    %cst_58 = arith.constant dense<0.000000e+00> : vector<16x32xf32>
    %199 = tpu.matmul %198, %186, %cst_58 {dimension_numbers = #tpu.dot_dimension_numbers<[1], [0], [0], [1], [0, 0, 1, 1], [], []>} : vector<16x16xf32>, vector<16x32xf32>, vector<16x32xf32> -> vector<16x32xf32>
    %200 = arith.addf %183, %199 : vector<16x32xf32>
    %201 = vector.extract_strided_slice %167 {offsets = [0, 16], sizes = [16, 8], strides = [1, 1]} : vector<16x192xf32> to vector<16x8xf32>
    %202 = vector.extract_strided_slice %167 {offsets = [0, 48], sizes = [16, 8], strides = [1, 1]} : vector<16x192xf32> to vector<16x8xf32>
    %203 = vector.extract_strided_slice %167 {offsets = [0, 128], sizes = [16, 32], strides = [1, 1]} : vector<16x192xf32> to vector<16x32xf32>
    %cst_59 = arith.constant dense<0.000000e+00> : vector<16x16xf32>
    %204 = tpu.matmul %201, %202, %cst_59 {dimension_numbers = #tpu.dot_dimension_numbers<[1], [1], [0], [0], [0, 0, 1, 0], [], []>} : vector<16x8xf32>, vector<16x8xf32>, vector<16x16xf32> -> vector<16x16xf32>
    %205 = arith.addf %204, %10 : vector<16x16xf32>
    %cst_60 = arith.constant dense<0xFF800000> : vector<16xf32>
    %206 = vector.multi_reduction <maximumf>, %205, %cst_60 [1] : vector<16x16xf32> to vector<16xf32>
    %207 = vector.shape_cast %206 : vector<16xf32> to vector<16x1xf32>
    %208 = vector.broadcast %207 : vector<16x1xf32> to vector<16x16xf32>
    %209 = arith.subf %205, %208 : vector<16x16xf32>
    %210 = math.exp %209 : vector<16x16xf32>
    %cst_61 = arith.constant dense<0.000000e+00> : vector<16xf32>
    %211 = vector.multi_reduction <add>, %210, %cst_61 [1] : vector<16x16xf32> to vector<16xf32>
    %212 = vector.shape_cast %211 : vector<16xf32> to vector<16x1xf32>
    %213 = tpu.reciprocal %212 : vector<16x1xf32> -> vector<16x1xf32>
    %214 = vector.broadcast %213 : vector<16x1xf32> to vector<16x16xf32>
    %215 = arith.mulf %210, %214 : vector<16x16xf32>
    %cst_62 = arith.constant dense<0.000000e+00> : vector<16x32xf32>
    %216 = tpu.matmul %215, %203, %cst_62 {dimension_numbers = #tpu.dot_dimension_numbers<[1], [0], [0], [1], [0, 0, 1, 1], [], []>} : vector<16x16xf32>, vector<16x32xf32>, vector<16x32xf32> -> vector<16x32xf32>
    %217 = arith.addf %200, %216 : vector<16x32xf32>
    %218 = vector.extract_strided_slice %167 {offsets = [0, 24], sizes = [16, 8], strides = [1, 1]} : vector<16x192xf32> to vector<16x8xf32>
    %219 = vector.extract_strided_slice %167 {offsets = [0, 56], sizes = [16, 8], strides = [1, 1]} : vector<16x192xf32> to vector<16x8xf32>
    %220 = vector.extract_strided_slice %167 {offsets = [0, 160], sizes = [16, 32], strides = [1, 1]} : vector<16x192xf32> to vector<16x32xf32>
    %cst_63 = arith.constant dense<0.000000e+00> : vector<16x16xf32>
    %221 = tpu.matmul %218, %219, %cst_63 {dimension_numbers = #tpu.dot_dimension_numbers<[1], [1], [0], [0], [0, 0, 1, 0], [], []>} : vector<16x8xf32>, vector<16x8xf32>, vector<16x16xf32> -> vector<16x16xf32>
    %222 = arith.addf %221, %10 : vector<16x16xf32>
    %cst_64 = arith.constant dense<0xFF800000> : vector<16xf32>
    %223 = vector.multi_reduction <maximumf>, %222, %cst_64 [1] : vector<16x16xf32> to vector<16xf32>
    %224 = vector.shape_cast %223 : vector<16xf32> to vector<16x1xf32>
    %225 = vector.broadcast %224 : vector<16x1xf32> to vector<16x16xf32>
    %226 = arith.subf %222, %225 : vector<16x16xf32>
    %227 = math.exp %226 : vector<16x16xf32>
    %cst_65 = arith.constant dense<0.000000e+00> : vector<16xf32>
    %228 = vector.multi_reduction <add>, %227, %cst_65 [1] : vector<16x16xf32> to vector<16xf32>
    %229 = vector.shape_cast %228 : vector<16xf32> to vector<16x1xf32>
    %230 = tpu.reciprocal %229 : vector<16x1xf32> -> vector<16x1xf32>
    %231 = vector.broadcast %230 : vector<16x1xf32> to vector<16x16xf32>
    %232 = arith.mulf %227, %231 : vector<16x16xf32>
    %cst_66 = arith.constant dense<0.000000e+00> : vector<16x32xf32>
    %233 = tpu.matmul %232, %220, %cst_66 {dimension_numbers = #tpu.dot_dimension_numbers<[1], [0], [0], [1], [0, 0, 1, 1], [], []>} : vector<16x16xf32>, vector<16x32xf32>, vector<16x32xf32> -> vector<16x32xf32>
    %234 = arith.addf %217, %233 : vector<16x32xf32>
    %235 = vector.broadcast %156 : vector<1x32xf32> to vector<16x32xf32>
    %236 = arith.addf %234, %235 : vector<16x32xf32>
    %237 = arith.addf %148, %236 : vector<16x32xf32>
    %cst_67 = arith.constant dense<0.000000e+00> : vector<16xf32>
    %238 = vector.multi_reduction <add>, %237, %cst_67 [1] : vector<16x32xf32> to vector<16xf32>
    %239 = vector.shape_cast %238 : vector<16xf32> to vector<16x1xf32>
    %cst_68 = arith.constant 3.200000e+01 : f32
    %240 = vector.broadcast %cst_68 : f32 to vector<16x1xf32>
    %241 = arith.divf %239, %240 : vector<16x1xf32>
    %242 = vector.broadcast %241 : vector<16x1xf32> to vector<16x32xf32>
    %243 = arith.subf %237, %242 : vector<16x32xf32>
    %244 = arith.mulf %243, %243 : vector<16x32xf32>
    %cst_69 = arith.constant dense<0.000000e+00> : vector<16xf32>
    %245 = vector.multi_reduction <add>, %244, %cst_69 [1] : vector<16x32xf32> to vector<16xf32>
    %246 = vector.shape_cast %245 : vector<16xf32> to vector<16x1xf32>
    %cst_70 = arith.constant 3.200000e+01 : f32
    %247 = vector.broadcast %cst_70 : f32 to vector<16x1xf32>
    %248 = arith.divf %246, %247 : vector<16x1xf32>
    %cst_71 = arith.constant 9.99999974E-6 : f32
    %249 = vector.broadcast %cst_71 : f32 to vector<16x1xf32>
    %250 = arith.addf %248, %249 : vector<16x1xf32>
    %251 = math.rsqrt %250 : vector<16x1xf32>
    %252 = vector.broadcast %251 : vector<16x1xf32> to vector<16x32xf32>
    %253 = arith.mulf %243, %252 : vector<16x32xf32>
    %254 = vector.broadcast %157 : vector<1x32xf32> to vector<16x32xf32>
    %255 = arith.mulf %253, %254 : vector<16x32xf32>
    %256 = vector.broadcast %158 : vector<1x32xf32> to vector<16x32xf32>
    %257 = arith.addf %255, %256 : vector<16x32xf32>
    %cst_72 = arith.constant dense<0.000000e+00> : vector<16x64xf32>
    %258 = tpu.matmul %257, %163, %cst_72 {dimension_numbers = #tpu.dot_dimension_numbers<[1], [0], [0], [1], [0, 0, 1, 1], [], []>} : vector<16x32xf32>, vector<32x64xf32>, vector<16x64xf32> -> vector<16x64xf32>
    %259 = vector.broadcast %161 : vector<1x64xf32> to vector<16x64xf32>
    %260 = arith.addf %258, %259 : vector<16x64xf32>
    %cst_73 = arith.constant 0.000000e+00 : f32
    %261 = vector.broadcast %cst_73 : f32 to vector<16x64xf32>
    %262 = arith.maximumf %260, %261 : vector<16x64xf32>
    %cst_74 = arith.constant dense<0.000000e+00> : vector<16x32xf32>
    %263 = tpu.matmul %262, %164, %cst_74 {dimension_numbers = #tpu.dot_dimension_numbers<[1], [0], [0], [1], [0, 0, 1, 1], [], []>} : vector<16x64xf32>, vector<64x32xf32>, vector<16x32xf32> -> vector<16x32xf32>
    %264 = vector.broadcast %162 : vector<1x32xf32> to vector<16x32xf32>
    %265 = arith.addf %263, %264 : vector<16x32xf32>
    %266 = arith.addf %257, %265 : vector<16x32xf32>
    %cst_75 = arith.constant dense<0.000000e+00> : vector<16xf32>
    %267 = vector.multi_reduction <add>, %266, %cst_75 [1] : vector<16x32xf32> to vector<16xf32>
    %268 = vector.shape_cast %267 : vector<16xf32> to vector<16x1xf32>
    %cst_76 = arith.constant 3.200000e+01 : f32
    %269 = vector.broadcast %cst_76 : f32 to vector<16x1xf32>
    %270 = arith.divf %268, %269 : vector<16x1xf32>
    %271 = vector.broadcast %270 : vector<16x1xf32> to vector<16x32xf32>
    %272 = arith.subf %266, %271 : vector<16x32xf32>
    %273 = arith.mulf %272, %272 : vector<16x32xf32>
    %cst_77 = arith.constant dense<0.000000e+00> : vector<16xf32>
    %274 = vector.multi_reduction <add>, %273, %cst_77 [1] : vector<16x32xf32> to vector<16xf32>
    %275 = vector.shape_cast %274 : vector<16xf32> to vector<16x1xf32>
    %cst_78 = arith.constant 3.200000e+01 : f32
    %276 = vector.broadcast %cst_78 : f32 to vector<16x1xf32>
    %277 = arith.divf %275, %276 : vector<16x1xf32>
    %cst_79 = arith.constant 9.99999974E-6 : f32
    %278 = vector.broadcast %cst_79 : f32 to vector<16x1xf32>
    %279 = arith.addf %277, %278 : vector<16x1xf32>
    %280 = math.rsqrt %279 : vector<16x1xf32>
    %281 = vector.broadcast %280 : vector<16x1xf32> to vector<16x32xf32>
    %282 = arith.mulf %272, %281 : vector<16x32xf32>
    %283 = vector.broadcast %159 : vector<1x32xf32> to vector<16x32xf32>
    %284 = arith.mulf %282, %283 : vector<16x32xf32>
    %285 = vector.broadcast %160 : vector<1x32xf32> to vector<16x32xf32>
    %286 = arith.addf %284, %285 : vector<16x32xf32>
    %c0_80 = arith.constant 0 : index
    %c0_81 = arith.constant 0 : index
    %287 = vector.load %arg4[%c0_80, %c0_81] : memref<16x32xf32, #tpu.memory_space<vmem>>, vector<16x32xf32>
    tpu.vector_store %arg4[%c0_80, %c0_81], %286 {strides = array<i32>} : memref<16x32xf32, #tpu.memory_space<vmem>>, vector<16x32xf32>,
    return
  }
}

</mosaic_0001>

<llo_original>
// kernel: transformer_encoder.1
$region0: #{transformer_encoder.1}
  #allocation0 [shape = 'u32[]', space=smem, size = 0x4, offset = 0x4, fixed_abs, tag = 'smem constant byte address 0x4 - core index']
  #allocation1 [shape = 'u32[144,128]{1,0:T(1,128)}', space=vmem, size = 0x12000, scoped, tag = 'internal scratch']
  %s0 = inlined_call_operand.vmem [shape: f32[16,32], index: 0, kind: input, shape index: {}]
  %s1 = inlined_call_operand.vmem [shape: f32[2,32,192], index: 1, kind: input, shape index: {}]
  %s2 = inlined_call_operand.vmem [shape: f32[2,96,64], index: 2, kind: input, shape index: {}]
  %s3 = inlined_call_operand.vmem [shape: f32[2,8,192], index: 3, kind: input, shape index: {}]
  %s4 = inlined_call_operand.hbm [shape: f32[16,32], index: 4, kind: output, shape index: {}]
  %s5 = sld [smem:[#allocation0]]
  $region26: #{transformer_encoder.1} parent=0
    _
  %s7 = ssub.s32 1, %s5
  %s8 = scalar_select 0, %s7, %s5
  $region1: #{transformer_encoder.1} parent=0
    #allocation2 [shape = 'u8[8192]{0}', space=vmem, size = 0x2000, scoped, tag = 'output window, operand 0, single buffered']
    #allocation3 [shape = 's32[1]{0}', space=sflag, size = 0x4, scoped, tag = 'scoped memory for transformer_encoder.1']
    %9 = vsyncpa [#allocation3], 0
    // Predicated region
    $region2: #{transformer_encoder.1} parent=1 // pred_check
      _
    $region3: #{transformer_encoder.1} parent=1 // pred_check_branch
      %11 = sbr.rel (0) target = $region5
    $region4: #{transformer_encoder.1} parent=1 // pred_region
      _
    $region5: #{transformer_encoder.1} parent=1 // pred_fallthru
      _
    // Predicated region
    $region6: #{transformer_encoder.1} parent=1 // pred_check
      _
    $region7: #{transformer_encoder.1} parent=1 // pred_check_branch
      %13 = sbr.rel (0) target = $region9
    $region8: #{transformer_encoder.1} parent=1 // pred_region
      _
    $region9: #{transformer_encoder.1} parent=1 // pred_fallthru
      _
    // Predicated region
    $region10: #{transformer_encoder.1} parent=1 // pred_check
      _
    $region11: #{transformer_encoder.1} parent=1 // pred_check_branch
      %15 = sbr.rel (0) target = $region13
    $region12: #{transformer_encoder.1} parent=1 // pred_region
      _
    $region13: #{transformer_encoder.1} parent=1 // pred_fallthru
      _
    // Predicated region
    $region14: #{transformer_encoder.1} parent=1 // pred_check
      _
    $region15: #{transformer_encoder.1} parent=1 // pred_check_branch
      %17 = sbr.rel (0) target = $region17
    $region16: #{transformer_encoder.1} parent=1 // pred_region
      _
    $region17: #{transformer_encoder.1} parent=1 // pred_fallthru
      _
    %v18 = vld [vmem:[%s0] sm:$0xff]
    %v19 = vld [vmem:[%s0 + $0x8] sm:$0xff]
    %v20 = vlaneseq
    %v21 = vshrl.u32 %v20, 7
    %v22 = vadd.s32 %v21, 8
    %v23 = vlaneseq
    %v24 = vand.u32 %v23, 127
    %v25 = vand.u32 %v21, 1
    %v26 = vand.u32 %v22, 1
    %v27 = vand.u32 %v24, 1
    %vm28 = vcmp.eq.s32.totalorder %v25, %v27
    %vm29 = vcmp.eq.s32.totalorder %v26, %v27
    %v30 = vsel %vm28, 0.0, -1e+30
    %v31 = vsel %vm29, 0.0, -1e+30
    %v32 = vld [vmem:[%s1] sm:$0xff]
    %v33 = vld [vmem:[%s1 + $0x8] sm:$0xff]
    %v34 = vld [vmem:[%s1 + $0x10] sm:$0xff]
    %v35 = vld [vmem:[%s1 + $0x18] sm:$0xff]
    %v36 = vld [vmem:[%s1 + $0x20] sm:$0xff]
    %v37 = vld [vmem:[%s1 + $0x28] sm:$0xff]
    %v38 = vld [vmem:[%s1 + $0x30] sm:$0xff]
    %v39 = vld [vmem:[%s1 + $0x38] sm:$0xff]
    %v40 = vld [vmem:[%s2] sm:$0xff]
    %v41 = vld [vmem:[%s2 + $0x8] sm:$0xff]
    %v42 = vld [vmem:[%s2 + $0x10] sm:$0xff]
    %v43 = vld [vmem:[%s2 + $0x18] sm:$0xff]
    %v44 = vld [vmem:[%s2 + $0x20] sm:$0xff]
    %v45 = vld [vmem:[%s2 + $0x28] sm:$0xff]
    %v46 = vld [vmem:[%s2 + $0x30] sm:$0xff]
    %v47 = vld [vmem:[%s2 + $0x38] sm:$0xff]
    %v48 = vld [vmem:[%s2 + $0x40] sm:$0xff]
    %v49 = vld [vmem:[%s2 + $0x48] sm:$0xff]
    %v50 = vld [vmem:[%s2 + $0x50] sm:$0xff]
    %v51 = vld [vmem:[%s2 + $0x58] sm:$0xff]
    %v52 = vld [vmem:[%s3] sm:$0xff]
    %v53 = vld [vmem:[%s3 + $0x8] sm:$0xff]
    %v54 = vlaneseq
    %v55 = vshrl.u32 %v54, 7
    %v56 = vsub.s32 0, %v55
    %v57 = vrot.slane %v52, %v56
    %v58 = vlaneseq
    %v59 = vshrl.u32 %v58, 7
    %v60 = vsub.s32 0, %v59
    %v61 = vrot.slane %v53, %v60
    %vm62 = vcmask 261120
    %v64 = vsel %vm62, %v18, 0
    %v67 = vsel %vm62, %v19, 0
    %69 = vmatprep.subr.mxu0 0.0
    %70 = vmatpush1.msra.mxu0 0.0
    %71 = vmatprep.subr.mxu0 0.0
    %72 = vmatpush1.msra.mxu0 0.0
    %73 = vmatprep.subr.mxu0 0.0
    %74 = vmatpush1.msra.mxu0 0.0
    %75 = vmatprep.subr.mxu0 0.0
    %76 = vmatpush1.msra.mxu0 0.0
    %77 = vmatprep.subr.mxu0 0.0
    %78 = vmatpush1.msra.mxu0 0.0
    %79 = vmatprep.subr.mxu0 0.0
    %80 = vmatpush1.msra.mxu0 0.0
    %81 = vmatprep.subr.mxu0 0.0
    %82 = vmatpush1.msra.mxu0 0.0
    %83 = vmatprep.subr.mxu0 0.0
    %84 = vmatpush1.msra.mxu0 0.0
    %85 = vmatprep.subr.mxu0 0.0
    %86 = vmatpush1.msra.mxu0 0.0
    %87 = vmatprep.subr.mxu0 0.0
    %88 = vmatpush1.msra.mxu0 0.0
    %89 = vmatprep.subr.mxu0 0.0
    %90 = vmatpush1.msra.mxu0 0.0
    %91 = vmatprep.subr.mxu0 0.0
    %92 = vmatpush1.msra.mxu0 0.0
    %93 = vmatprep.subr.mxu0 %v39
    %94 = vmatpush1.msra.mxu0 %v38
    %95 = vmatprep.subr.mxu0 %v37
    %96 = vmatpush1.msra.mxu0 %v36
    %97 = vmatprep.subr.mxu0 %v35
    %98 = vmatpush1.msra.mxu0 %v34
    %99 = vmatprep.subr.mxu0 %v33
    %100 = vmatpush1.msra.mxu0 %v32
    %101 = vmatprep.subr.mxu0 0.0
    %102 = vmatpush2.msra.mxu0 0.0
    %103 = vmatprep.subr.mxu0 0.0
    %104 = vmatpush2.msra.mxu0 0.0
    %105 = vmatprep.subr.mxu0 0.0
    %106 = vmatpush2.msra.mxu0 0.0
    %107 = vmatprep.subr.mxu0 0.0
    %108 = vmatpush2.msra.mxu0 0.0
    %109 = vmatprep.subr.mxu0 0.0
    %110 = vmatpush2.msra.mxu0 0.0
    %111 = vmatprep.subr.mxu0 0.0
    %112 = vmatpush2.msra.mxu0 0.0
    %113 = vmatprep.subr.mxu0 0.0
    %114 = vmatpush2.msra.mxu0 0.0
    %115 = vmatprep.subr.mxu0 0.0
    %116 = vmatpush2.msra.mxu0 0.0
    %117 = vmatprep.subr.mxu0 0.0
    %118 = vmatpush2.msra.mxu0 0.0
    %119 = vmatprep.subr.mxu0 0.0
    %120 = vmatpush2.msra.mxu0 0.0
    %121 = vmatprep.subr.mxu0 0.0
    %122 = vmatpush2.msra.mxu0 0.0
    %123 = vmatprep.subr.mxu0 0.0
    %124 = vmatpush2.msra.mxu0 0.0
    %125 = vmatprep.subr.mxu0 0.0
    %126 = vmatpush2.msra.mxu0 0.0
    %127 = vmatprep.subr.mxu0 0.0
    %128 = vmatpush2.msra.mxu0 0.0
    %129 = vmatprep.subr.mxu0 0.0
    %130 = vmatpush2.msra.mxu0 0.0
    %131 = vmatprep.subr.mxu0 0.0
    %132 = vmatpush2.msra.mxu0 0.0
    %133 = vmatprep.mubr.f32.mxu0 0.0
    %134 = vmatmul.mubr.f32.gmra.mxu0 %v64
    %v135 = vpop.f32.mrf.mxu0
    %v136 = vadd.f32 %v57, %v135
    %v137 = vpop.f32.mrf.mxu0
    %v138 = vadd.f32 %v61, %v137
    %139 = vmatprep.mubr.f32.mxu0 0.0
    %140 = vmatmul.mubr.f32.gmra.mxu0 %v67
    %v141 = vpop.f32.mrf.mxu0
    %v142 = vadd.f32 %v57, %v141
    %v143 = vpop.f32.mrf.mxu0
    %v144 = vadd.f32 %v61, %v143
    %145 = vdwg.mxu0
    %148 = vrot.lane.b32.xlu0 %v136, 96
    %v149 = vpop.permute.xlu0 %148
    %150 = vrot.lane.b32.xlu0 %v142, 96
    %v151 = vpop.permute.xlu0 %150
    %vm152 = vcmask 64512
    %v153 = vsel %vm152, %v136, 0
    %v155 = vsel %vm152, %v142, 0
    %v157 = vsel %vm152, %v149, 0
    %v159 = vsel %vm152, %v151, 0
    %161 = vmatprep.subr.mxu0 0.0
    %162 = vmatpush1.xpose.msra.mxu0 0.0
    %163 = vmatprep.subr.mxu0 0.0
    %164 = vmatpush1.xpose.msra.mxu0 0.0
    %165 = vmatprep.subr.mxu0 0.0
    %166 = vmatpush1.xpose.msra.mxu0 0.0
    %167 = vmatprep.subr.mxu0 0.0
    %168 = vmatpush1.xpose.msra.mxu0 0.0
    %169 = vmatprep.subr.mxu0 0.0
    %170 = vmatpush1.xpose.msra.mxu0 0.0
    %171 = vmatprep.subr.mxu0 0.0
    %172 = vmatpush1.xpose.msra.mxu0 0.0
    %173 = vmatprep.subr.mxu0 0.0
    %174 = vmatpush1.xpose.msra.mxu0 0.0
    %175 = vmatprep.subr.mxu0 0.0
    %176 = vmatpush1.xpose.msra.mxu0 0.0
    %177 = vmatprep.subr.mxu0 0.0
    %178 = vmatpush1.xpose.msra.mxu0 0.0
    %179 = vmatprep.subr.mxu0 0.0
    %180 = vmatpush1.xpose.msra.mxu0 0.0
    %181 = vmatprep.subr.mxu0 0.0
    %182 = vmatpush1.xpose.msra.mxu0 0.0
    %183 = vmatprep.subr.mxu0 0.0
    %184 = vmatpush1.xpose.msra.mxu0 0.0
    %185 = vmatprep.subr.mxu0 0.0
    %186 = vmatpush1.xpose.msra.mxu0 0.0
    %187 = vmatprep.subr.mxu0 0.0
    %188 = vmatpush1.xpose.msra.mxu0 0.0
    %189 = vmatprep.subr.mxu0 0.0
    %190 = vmatpush1.xpose.msra.mxu0 %v159
    %191 = vmatprep.subr.mxu0 0.0
    %192 = vmatpush1.xpose.msra.mxu0 %v157
    %193 = vmatprep.subr.mxu0 0.0
    %194 = vmatpush2.xpose.msra.mxu0 0.0
    %195 = vmatprep.subr.mxu0 0.0
    %196 = vmatpush2.xpose.msra.mxu0 0.0
    %197 = vmatprep.subr.mxu0 0.0
    %198 = vmatpush2.xpose.msra.mxu0 0.0
    %199 = vmatprep.subr.mxu0 0.0
    %200 = vmatpush2.xpose.msra.mxu0 0.0
    %201 = vmatprep.subr.mxu0 0.0
    %202 = vmatpush2.xpose.msra.mxu0 0.0
    %203 = vmatprep.subr.mxu0 0.0
    %204 = vmatpush2.xpose.msra.mxu0 0.0
    %205 = vmatprep.subr.mxu0 0.0
    %206 = vmatpush2.xpose.msra.mxu0 0.0
    %207 = vmatprep.subr.mxu0 0.0
    %208 = vmatpush2.xpose.msra.mxu0 0.0
    %209 = vmatprep.subr.mxu0 0.0
    %210 = vmatpush2.xpose.msra.mxu0 0.0
    %211 = vmatprep.subr.mxu0 0.0
    %212 = vmatpush2.xpose.msra.mxu0 0.0
    %213 = vmatprep.subr.mxu0 0.0
    %214 = vmatpush2.xpose.msra.mxu0 0.0
    %215 = vmatprep.subr.mxu0 0.0
    %216 = vmatpush2.xpose.msra.mxu0 0.0
    %217 = vmatprep.subr.mxu0 0.0
    %218 = vmatpush2.xpose.msra.mxu0 0.0
    %219 = vmatprep.subr.mxu0 0.0
    %220 = vmatpush2.xpose.msra.mxu0 0.0
    %221 = vmatprep.subr.mxu0 0.0
    %222 = vmatpush2.xpose.msra.mxu0 0.0
    %223 = vmatprep.subr.mxu0 0.0
    %224 = vmatpush2.xpose.msra.mxu0 0.0
    %225 = vmatprep.mubr.f32.mxu0 0.0
    %226 = vmatmul.mubr.f32.gmra.mxu0 %v153
    %v227 = vpop.f32.mrf.mxu0
    %v228 = vadd.f32 %v30, %v227
    %v229 = vpop.f32.mrf.mxu0
    %230 = vmatprep.mubr.f32.mxu0 0.0
    %231 = vmatmul.mubr.f32.gmra.mxu0 %v155
    %v232 = vpop.f32.mrf.mxu0
    %v233 = vadd.f32 %v31, %v232
    %v234 = vpop.f32.mrf.mxu0
    %235 = vdwg.mxu0
    %vm236 = vcmask 130048
    %v237 = vsel %vm236, %v228, -inf
    %238 = vmax.xlane.f32.xlu0 %v237
    %v239 = vpop.xlane.xlu0 %238
    %v240 = vsel %vm236, %v233, -inf
    %241 = vmax.xlane.f32.xlu0 %v240
    %v242 = vpop.xlane.xlu0 %241
    %v243 = vsub.f32 %v228, %v239
    %v244 = vsub.f32 %v233, %v242
    %v245 = vmul.f32 %v243, 1.442695
    %v246 = vpow.pop %v245
    %v247 = vmul.f32 %v244, 1.442695
    %v248 = vpow.pop %v247
    %v249 = vsel %vm236, %v246, 0.0
    %250 = vadd.xlane.f32.xlu0 %v249
    %v251 = vpop.xlane.xlu0 %250
    %v252 = vsel %vm236, %v248, 0.0
    %253 = vadd.xlane.f32.xlu0 %v252
    %v254 = vpop.xlane.xlu0 %253
    %v255 = vrcp.pop %v251
    %v256 = vrcp.pop %v254
    %v257 = vmul.f32 %v246, %v255
    %v258 = vmul.f32 %v248, %v256
    %259 = vrot.lane.b32.xlu0 %v136, 120
    %v260 = vpop.permute.xlu0 %259
    %261 = vrot.lane.b32.xlu0 %v142, 120
    %v262 = vpop.permute.xlu0 %261
    %263 = vrot.lane.b32.xlu0 %v136, 88
    %v264 = vpop.permute.xlu0 %263
    %265 = vrot.lane.b32.xlu0 %v142, 88
    %v266 = vpop.permute.xlu0 %265
    %v267 = vsel %vm152, %v260, 0
    %v269 = vsel %vm152, %v262, 0
    %v271 = vsel %vm152, %v264, 0
    %v273 = vsel %vm152, %v266, 0
    %275 = vmatprep.subr.mxu0 0.0
    %276 = vmatpush1.xpose.msra.mxu0 0.0
    %277 = vmatprep.subr.mxu0 0.0
    %278 = vmatpush1.xpose.msra.mxu0 0.0
    %279 = vmatprep.subr.mxu0 0.0
    %280 = vmatpush1.xpose.msra.mxu0 0.0
    %281 = vmatprep.subr.mxu0 0.0
    %282 = vmatpush1.xpose.msra.mxu0 0.0
    %283 = vmatprep.subr.mxu0 0.0
    %284 = vmatpush1.xpose.msra.mxu0 0.0
    %285 = vmatprep.subr.mxu0 0.0
    %286 = vmatpush1.xpose.msra.mxu0 0.0
    %287 = vmatprep.subr.mxu0 0.0
    %288 = vmatpush1.xpose.msra.mxu0 0.0
    %289 = vmatprep.subr.mxu0 0.0
    %290 = vmatpush1.xpose.msra.mxu0 0.0
    %291 = vmatprep.subr.mxu0 0.0
    %292 = vmatpush1.xpose.msra.mxu0 0.0
    %293 = vmatprep.subr.mxu0 0.0
    %294 = vmatpush1.xpose.msra.mxu0 0.0
    %295 = vmatprep.subr.mxu0 0.0
    %296 = vmatpush1.xpose.msra.mxu0 0.0
    %297 = vmatprep.subr.mxu0 0.0
    %298 = vmatpush1.xpose.msra.mxu0 0.0
    %299 = vmatprep.subr.mxu0 0.0
    %300 = vmatpush1.xpose.msra.mxu0 0.0
    %301 = vmatprep.subr.mxu0 0.0
    %302 = vmatpush1.xpose.msra.mxu0 0.0
    %303 = vmatprep.subr.mxu0 0.0
    %304 = vmatpush1.xpose.msra.mxu0 %v273
    %305 = vmatprep.subr.mxu0 0.0
    %306 = vmatpush1.xpose.msra.mxu0 %v271
    %307 = vmatprep.subr.mxu0 0.0
    %308 = vmatpush2.xpose.msra.mxu0 0.0
    %309 = vmatprep.subr.mxu0 0.0
    %310 = vmatpush2.xpose.msra.mxu0 0.0
    %311 = vmatprep.subr.mxu0 0.0
    %312 = vmatpush2.xpose.msra.mxu0 0.0
    %313 = vmatprep.subr.mxu0 0.0
    %314 = vmatpush2.xpose.msra.mxu0 0.0
    %315 = vmatprep.subr.mxu0 0.0
    %316 = vmatpush2.xpose.msra.mxu0 0.0
    %317 = vmatprep.subr.mxu0 0.0
    %318 = vmatpush2.xpose.msra.mxu0 0.0
    %319 = vmatprep.subr.mxu0 0.0
    %320 = vmatpush2.xpose.msra.mxu0 0.0
    %321 = vmatprep.subr.mxu0 0.0
    %322 = vmatpush2.xpose.msra.mxu0 0.0
    %323 = vmatprep.subr.mxu0 0.0
    %324 = vmatpush2.xpose.msra.mxu0 0.0
    %325 = vmatprep.subr.mxu0 0.0
    %326 = vmatpush2.xpose.msra.mxu0 0.0
    %327 = vmatprep.subr.mxu0 0.0
    %328 = vmatpush2.xpose.msra.mxu0 0.0
    %329 = vmatprep.subr.mxu0 0.0
    %330 = vmatpush2.xpose.msra.mxu0 0.0
    %331 = vmatprep.subr.mxu0 0.0
    %332 = vmatpush2.xpose.msra.mxu0 0.0
    %333 = vmatprep.subr.mxu0 0.0
    %334 = vmatpush2.xpose.msra.mxu0 0.0
    %335 = vmatprep.subr.mxu0 0.0
    %336 = vmatpush2.xpose.msra.mxu0 0.0
    %337 = vmatprep.subr.mxu0 0.0
    %338 = vmatpush2.xpose.msra.mxu0 0.0
    %339 = vmatprep.mubr.f32.mxu0 0.0
    %340 = vmatmul.mubr.f32.gmra.mxu0 %v267
    %v341 = vpop.f32.mrf.mxu0
    %v342 = vadd.f32 %v30, %v341
    %v343 = vpop.f32.mrf.mxu0
    %344 = vmatprep.mubr.f32.mxu0 0.0
    %345 = vmatmul.mubr.f32.gmra.mxu0 %v269
    %v346 = vpop.f32.mrf.mxu0
    %v347 = vadd.f32 %v31, %v346
    %v348 = vpop.f32.mrf.mxu0
    %349 = vdwg.mxu0
    %v350 = vsel %vm236, %v342, -inf
    %351 = vmax.xlane.f32.xlu0 %v350
    %v352 = vpop.xlane.xlu0 %351
    %v353 = vsel %vm236, %v347, -inf
    %354 = vmax.xlane.f32.xlu0 %v353
    %v355 = vpop.xlane.xlu0 %354
    %v356 = vsub.f32 %v342, %v352
    %v357 = vsub.f32 %v347, %v355
    %v358 = vmul.f32 %v356, 1.442695
    %v359 = vpow.pop %v358
    %v360 = vmul.f32 %v357, 1.442695
    %v361 = vpow.pop %v360
    %v362 = vsel %vm236, %v359, 0.0
    %363 = vadd.xlane.f32.xlu0 %v362
    %v364 = vpop.xlane.xlu0 %363
    %v365 = vsel %vm236, %v361, 0.0
    %366 = vadd.xlane.f32.xlu0 %v365
    %v367 = vpop.xlane.xlu0 %366
    %v368 = vrcp.pop %v364
    %v369 = vrcp.pop %v367
    %v370 = vmul.f32 %v359, %v368
    %v371 = vmul.f32 %v361, %v369
    %372 = vrot.lane.b32.xlu0 %v136, 32
    %v373 = vpop.permute.xlu0 %372
    %374 = vrot.lane.b32.xlu0 %v142, 32
    %v375 = vpop.permute.xlu0 %374
    %v379 = vsel %vm236, %v370, 0
    %v382 = vsel %vm236, %v371, 0
    %384 = vmatprep.subr.mxu0 0.0
    %385 = vmatpush1.msra.mxu0 0.0
    %386 = vmatprep.subr.mxu0 0.0
    %387 = vmatpush1.msra.mxu0 0.0
    %388 = vmatprep.subr.mxu0 0.0
    %389 = vmatpush1.msra.mxu0 0.0
    %390 = vmatprep.subr.mxu0 0.0
    %391 = vmatpush1.msra.mxu0 0.0
    %392 = vmatprep.subr.mxu0 0.0
    %393 = vmatpush1.msra.mxu0 0.0
    %394 = vmatprep.subr.mxu0 0.0
    %395 = vmatpush1.msra.mxu0 0.0
    %396 = vmatprep.subr.mxu0 0.0
    %397 = vmatpush1.msra.mxu0 0.0
    %398 = vmatprep.subr.mxu0 0.0
    %399 = vmatpush1.msra.mxu0 0.0
    %400 = vmatprep.subr.mxu0 0.0
    %401 = vmatpush1.msra.mxu0 0.0
    %402 = vmatprep.subr.mxu0 0.0
    %403 = vmatpush1.msra.mxu0 0.0
    %404 = vmatprep.subr.mxu0 0.0
    %405 = vmatpush1.msra.mxu0 0.0
    %406 = vmatprep.subr.mxu0 0.0
    %407 = vmatpush1.msra.mxu0 0.0
    %408 = vmatprep.subr.mxu0 0.0
    %409 = vmatpush1.msra.mxu0 0.0
    %410 = vmatprep.subr.mxu0 0.0
    %411 = vmatpush1.msra.mxu0 0.0
    %412 = vmatprep.subr.mxu0 0.0
    %413 = vmatpush1.msra.mxu0 %v375
    %414 = vmatprep.subr.mxu0 0.0
    %415 = vmatpush1.msra.mxu0 %v373
    %416 = vmatprep.subr.mxu0 0.0
    %417 = vmatpush2.msra.mxu0 0.0
    %418 = vmatprep.subr.mxu0 0.0
    %419 = vmatpush2.msra.mxu0 0.0
    %420 = vmatprep.subr.mxu0 0.0
    %421 = vmatpush2.msra.mxu0 0.0
    %422 = vmatprep.subr.mxu0 0.0
    %423 = vmatpush2.msra.mxu0 0.0
    %424 = vmatprep.subr.mxu0 0.0
    %425 = vmatpush2.msra.mxu0 0.0
    %426 = vmatprep.subr.mxu0 0.0
    %427 = vmatpush2.msra.mxu0 0.0
    %428 = vmatprep.subr.mxu0 0.0
    %429 = vmatpush2.msra.mxu0 0.0
    %430 = vmatprep.subr.mxu0 0.0
    %431 = vmatpush2.msra.mxu0 0.0
    %432 = vmatprep.subr.mxu0 0.0
    %433 = vmatpush2.msra.mxu0 0.0
    %434 = vmatprep.subr.mxu0 0.0
    %435 = vmatpush2.msra.mxu0 0.0
    %436 = vmatprep.subr.mxu0 0.0
    %437 = vmatpush2.msra.mxu0 0.0
    %438 = vmatprep.subr.mxu0 0.0
    %439 = vmatpush2.msra.mxu0 0.0
    %440 = vmatprep.subr.mxu0 0.0
    %441 = vmatpush2.msra.mxu0 0.0
    %442 = vmatprep.subr.mxu0 0.0
    %443 = vmatpush2.msra.mxu0 0.0
    %444 = vmatprep.subr.mxu0 0.0
    %445 = vmatpush2.msra.mxu0 0.0
    %446 = vmatprep.subr.mxu0 0.0
    %447 = vmatpush2.msra.mxu0 0.0
    %448 = vmatprep.mubr.f32.mxu0 0.0
    %449 = vmatmul.mubr.f32.gmra.mxu0 %v379
    %v450 = vpop.f32.mrf.mxu0
    %v451 = vadd.f32 0.0, %v450
    %v452 = vpop.f32.mrf.mxu0
    %453 = vmatprep.mubr.f32.mxu0 0.0
    %454 = vmatmul.mubr.f32.gmra.mxu0 %v382
    %v455 = vpop.f32.mrf.mxu0
    %v456 = vadd.f32 0.0, %v455
    %v457 = vpop.f32.mrf.mxu0
    %458 = vdwg.mxu0
    %459 = vrot.lane.b32.xlu0 %v136, 64
    %v460 = vpop.permute.xlu0 %459
    %461 = vrot.lane.b32.xlu0 %v142, 64
    %v462 = vpop.permute.xlu0 %461
    %v466 = vsel %vm236, %v257, 0
    %v469 = vsel %vm236, %v258, 0
    %471 = vmatprep.subr.mxu0 0.0
    %472 = vmatpush1.msra.mxu0 0.0
    %473 = vmatprep.subr.mxu0 0.0
    %474 = vmatpush1.msra.mxu0 0.0
    %475 = vmatprep.subr.mxu0 0.0
    %476 = vmatpush1.msra.mxu0 0.0
    %477 = vmatprep.subr.mxu0 0.0
    %478 = vmatpush1.msra.mxu0 0.0
    %479 = vmatprep.subr.mxu0 0.0
    %480 = vmatpush1.msra.mxu0 0.0
    %481 = vmatprep.subr.mxu0 0.0
    %482 = vmatpush1.msra.mxu0 0.0
    %483 = vmatprep.subr.mxu0 0.0
    %484 = vmatpush1.msra.mxu0 0.0
    %485 = vmatprep.subr.mxu0 0.0
    %486 = vmatpush1.msra.mxu0 0.0
    %487 = vmatprep.subr.mxu0 0.0
    %488 = vmatpush1.msra.mxu0 0.0
    %489 = vmatprep.subr.mxu0 0.0
    %490 = vmatpush1.msra.mxu0 0.0
    %491 = vmatprep.subr.mxu0 0.0
    %492 = vmatpush1.msra.mxu0 0.0
    %493 = vmatprep.subr.mxu0 0.0
    %494 = vmatpush1.msra.mxu0 0.0
    %495 = vmatprep.subr.mxu0 0.0
    %496 = vmatpush1.msra.mxu0 0.0
    %497 = vmatprep.subr.mxu0 0.0
    %498 = vmatpush1.msra.mxu0 0.0
    %499 = vmatprep.subr.mxu0 0.0
    %500 = vmatpush1.msra.mxu0 %v462
    %501 = vmatprep.subr.mxu0 0.0
    %502 = vmatpush1.msra.mxu0 %v460
    %503 = vmatprep.subr.mxu0 0.0
    %504 = vmatpush2.msra.mxu0 0.0
    %505 = vmatprep.subr.mxu0 0.0
    %506 = vmatpush2.msra.mxu0 0.0
    %507 = vmatprep.subr.mxu0 0.0
    %508 = vmatpush2.msra.mxu0 0.0
    %509 = vmatprep.subr.mxu0 0.0
    %510 = vmatpush2.msra.mxu0 0.0
    %511 = vmatprep.subr.mxu0 0.0
    %512 = vmatpush2.msra.mxu0 0.0
    %513 = vmatprep.subr.mxu0 0.0
    %514 = vmatpush2.msra.mxu0 0.0
    %515 = vmatprep.subr.mxu0 0.0
    %516 = vmatpush2.msra.mxu0 0.0
    %517 = vmatprep.subr.mxu0 0.0
    %518 = vmatpush2.msra.mxu0 0.0
    %519 = vmatprep.subr.mxu0 0.0
    %520 = vmatpush2.msra.mxu0 0.0
    %521 = vmatprep.subr.mxu0 0.0
    %522 = vmatpush2.msra.mxu0 0.0
    %523 = vmatprep.subr.mxu0 0.0
    %524 = vmatpush2.msra.mxu0 0.0
    %525 = vmatprep.subr.mxu0 0.0
    %526 = vmatpush2.msra.mxu0 0.0
    %527 = vmatprep.subr.mxu0 0.0
    %528 = vmatpush2.msra.mxu0 0.0
    %529 = vmatprep.subr.mxu0 0.0
    %530 = vmatpush2.msra.mxu0 0.0
    %531 = vmatprep.subr.mxu0 0.0
    %532 = vmatpush2.msra.mxu0 0.0
    %533 = vmatprep.subr.mxu0 0.0
    %534 = vmatpush2.msra.mxu0 0.0
    %535 = vmatprep.mubr.f32.mxu0 0.0
    %536 = vmatmul.mubr.f32.gmra.mxu0 %v466
    %v537 = vpop.f32.mrf.mxu0
    %v538 = vadd.f32 %v451, %v537
    %v539 = vpop.f32.mrf.mxu0
    %540 = vmatprep.mubr.f32.mxu0 0.0
    %541 = vmatmul.mubr.f32.gmra.mxu0 %v469
    %v542 = vpop.f32.mrf.mxu0
    %v543 = vadd.f32 %v456, %v542
    %v544 = vpop.f32.mrf.mxu0
    %545 = vdwg.mxu0
    %546 = vrot.lane.b32.xlu0 %v136, 112
    %v547 = vpop.permute.xlu0 %546
    %548 = vrot.lane.b32.xlu0 %v142, 112
    %v549 = vpop.permute.xlu0 %548
    %550 = vrot.lane.b32.xlu0 %v136, 80
    %v551 = vpop.permute.xlu0 %550
    %552 = vrot.lane.b32.xlu0 %v142, 80
    %v553 = vpop.permute.xlu0 %552
    %v554 = vsel %vm152, %v547, 0
    %v556 = vsel %vm152, %v549, 0
    %v558 = vsel %vm152, %v551, 0
    %v560 = vsel %vm152, %v553, 0
    %562 = vmatprep.subr.mxu0 0.0
    %563 = vmatpush1.xpose.msra.mxu0 0.0
    %564 = vmatprep.subr.mxu0 0.0
    %565 = vmatpush1.xpose.msra.mxu0 0.0
    %566 = vmatprep.subr.mxu0 0.0
    %567 = vmatpush1.xpose.msra.mxu0 0.0
    %568 = vmatprep.subr.mxu0 0.0
    %569 = vmatpush1.xpose.msra.mxu0 0.0
    %570 = vmatprep.subr.mxu0 0.0
    %571 = vmatpush1.xpose.msra.mxu0 0.0
    %572 = vmatprep.subr.mxu0 0.0
    %573 = vmatpush1.xpose.msra.mxu0 0.0
    %574 = vmatprep.subr.mxu0 0.0
    %575 = vmatpush1.xpose.msra.mxu0 0.0
    %576 = vmatprep.subr.mxu0 0.0
    %577 = vmatpush1.xpose.msra.mxu0 0.0
    %578 = vmatprep.subr.mxu0 0.0
    %579 = vmatpush1.xpose.msra.mxu0 0.0
    %580 = vmatprep.subr.mxu0 0.0
    %581 = vmatpush1.xpose.msra.mxu0 0.0
    %582 = vmatprep.subr.mxu0 0.0
    %583 = vmatpush1.xpose.msra.mxu0 0.0
    %584 = vmatprep.subr.mxu0 0.0
    %585 = vmatpush1.xpose.msra.mxu0 0.0
    %586 = vmatprep.subr.mxu0 0.0
    %587 = vmatpush1.xpose.msra.mxu0 0.0
    %588 = vmatprep.subr.mxu0 0.0
    %589 = vmatpush1.xpose.msra.mxu0 0.0
    %590 = vmatprep.subr.mxu0 0.0
    %591 = vmatpush1.xpose.msra.mxu0 %v560
    %592 = vmatprep.subr.mxu0 0.0
    %593 = vmatpush1.xpose.msra.mxu0 %v558
    %594 = vmatprep.subr.mxu0 0.0
    %595 = vmatpush2.xpose.msra.mxu0 0.0
    %596 = vmatprep.subr.mxu0 0.0
    %597 = vmatpush2.xpose.msra.mxu0 0.0
    %598 = vmatprep.subr.mxu0 0.0
    %599 = vmatpush2.xpose.msra.mxu0 0.0
    %600 = vmatprep.subr.mxu0 0.0
    %601 = vmatpush2.xpose.msra.mxu0 0.0
    %602 = vmatprep.subr.mxu0 0.0
    %603 = vmatpush2.xpose.msra.mxu0 0.0
    %604 = vmatprep.subr.mxu0 0.0
    %605 = vmatpush2.xpose.msra.mxu0 0.0
    %606 = vmatprep.subr.mxu0 0.0
    %607 = vmatpush2.xpose.msra.mxu0 0.0
    %608 = vmatprep.subr.mxu0 0.0
    %609 = vmatpush2.xpose.msra.mxu0 0.0
    %610 = vmatprep.subr.mxu0 0.0
    %611 = vmatpush2.xpose.msra.mxu0 0.0
    %612 = vmatprep.subr.mxu0 0.0
    %613 = vmatpush2.xpose.msra.mxu0 0.0
    %614 = vmatprep.subr.mxu0 0.0
    %615 = vmatpush2.xpose.msra.mxu0 0.0
    %616 = vmatprep.subr.mxu0 0.0
    %617 = vmatpush2.xpose.msra.mxu0 0.0
    %618 = vmatprep.subr.mxu0 0.0
    %619 = vmatpush2.xpose.msra.mxu0 0.0
    %620 = vmatprep.subr.mxu0 0.0
    %621 = vmatpush2.xpose.msra.mxu0 0.0
    %622 = vmatprep.subr.mxu0 0.0
    %623 = vmatpush2.xpose.msra.mxu0 0.0
    %624 = vmatprep.subr.mxu0 0.0
    %625 = vmatpush2.xpose.msra.mxu0 0.0
    %626 = vmatprep.mubr.f32.mxu0 0.0
    %627 = vmatmul.mubr.f32.gmra.mxu0 %v554
    %v628 = vpop.f32.mrf.mxu0
    %v629 = vadd.f32 %v30, %v628
    %v630 = vpop.f32.mrf.mxu0
    %631 = vmatprep.mubr.f32.mxu0 0.0
    %632 = vmatmul.mubr.f32.gmra.mxu0 %v556
    %v633 = vpop.f32.mrf.mxu0
    %v634 = vadd.f32 %v31, %v633
    %v635 = vpop.f32.mrf.mxu0
    %636 = vdwg.mxu0
    %v637 = vsel %vm236, %v629, -inf
    %638 = vmax.xlane.f32.xlu0 %v637
    %v639 = vpop.xlane.xlu0 %638
    %v640 = vsel %vm236, %v634, -inf
    %641 = vmax.xlane.f32.xlu0 %v640
    %v642 = vpop.xlane.xlu0 %641
    %v643 = vsub.f32 %v629, %v639
    %v644 = vsub.f32 %v634, %v642
    %v645 = vmul.f32 %v643, 1.442695
    %v646 = vpow.pop %v645
    %v647 = vmul.f32 %v644, 1.442695
    %v648 = vpow.pop %v647
    %v649 = vsel %vm236, %v646, 0.0
    %650 = vadd.xlane.f32.xlu0 %v649
    %v651 = vpop.xlane.xlu0 %650
    %v652 = vsel %vm236, %v648, 0.0
    %653 = vadd.xlane.f32.xlu0 %v652
    %v654 = vpop.xlane.xlu0 %653
    %v655 = vrcp.pop %v651
    %v656 = vrcp.pop %v654
    %v657 = vmul.f32 %v646, %v655
    %v658 = vmul.f32 %v648, %v656
    %v660 = vsel %vm236, %v657, 0
    %v663 = vsel %vm236, %v658, 0
    %665 = vmatprep.subr.mxu0 0.0
    %666 = vmatpush1.msra.mxu0 0.0
    %667 = vmatprep.subr.mxu0 0.0
    %668 = vmatpush1.msra.mxu0 0.0
    %669 = vmatprep.subr.mxu0 0.0
    %670 = vmatpush1.msra.mxu0 0.0
    %671 = vmatprep.subr.mxu0 0.0
    %672 = vmatpush1.msra.mxu0 0.0
    %673 = vmatprep.subr.mxu0 0.0
    %674 = vmatpush1.msra.mxu0 0.0
    %675 = vmatprep.subr.mxu0 0.0
    %676 = vmatpush1.msra.mxu0 0.0
    %677 = vmatprep.subr.mxu0 0.0
    %678 = vmatpush1.msra.mxu0 0.0
    %679 = vmatprep.subr.mxu0 0.0
    %680 = vmatpush1.msra.mxu0 0.0
    %681 = vmatprep.subr.mxu0 0.0
    %682 = vmatpush1.msra.mxu0 0.0
    %683 = vmatprep.subr.mxu0 0.0
    %684 = vmatpush1.msra.mxu0 0.0
    %685 = vmatprep.subr.mxu0 0.0
    %686 = vmatpush1.msra.mxu0 0.0
    %687 = vmatprep.subr.mxu0 0.0
    %688 = vmatpush1.msra.mxu0 0.0
    %689 = vmatprep.subr.mxu0 0.0
    %690 = vmatpush1.msra.mxu0 0.0
    %691 = vmatprep.subr.mxu0 0.0
    %692 = vmatpush1.msra.mxu0 0.0
    %693 = vmatprep.subr.mxu0 0.0
    %694 = vmatpush1.msra.mxu0 %v144
    %695 = vmatprep.subr.mxu0 0.0
    %696 = vmatpush1.msra.mxu0 %v138
    %697 = vmatprep.subr.mxu0 0.0
    %698 = vmatpush2.msra.mxu0 0.0
    %699 = vmatprep.subr.mxu0 0.0
    %700 = vmatpush2.msra.mxu0 0.0
    %701 = vmatprep.subr.mxu0 0.0
    %702 = vmatpush2.msra.mxu0 0.0
    %703 = vmatprep.subr.mxu0 0.0
    %704 = vmatpush2.msra.mxu0 0.0
    %705 = vmatprep.subr.mxu0 0.0
    %706 = vmatpush2.msra.mxu0 0.0
    %707 = vmatprep.subr.mxu0 0.0
    %708 = vmatpush2.msra.mxu0 0.0
    %709 = vmatprep.subr.mxu0 0.0
    %710 = vmatpush2.msra.mxu0 0.0
    %711 = vmatprep.subr.mxu0 0.0
    %712 = vmatpush2.msra.mxu0 0.0
    %713 = vmatprep.subr.mxu0 0.0
    %714 = vmatpush2.msra.mxu0 0.0
    %715 = vmatprep.subr.mxu0 0.0
    %716 = vmatpush2.msra.mxu0 0.0
    %717 = vmatprep.subr.mxu0 0.0
    %718 = vmatpush2.msra.mxu0 0.0
    %719 = vmatprep.subr.mxu0 0.0
    %720 = vmatpush2.msra.mxu0 0.0
    %721 = vmatprep.subr.mxu0 0.0
    %722 = vmatpush2.msra.mxu0 0.0
    %723 = vmatprep.subr.mxu0 0.0
    %724 = vmatpush2.msra.mxu0 0.0
    %725 = vmatprep.subr.mxu0 0.0
    %726 = vmatpush2.msra.mxu0 0.0
    %727 = vmatprep.subr.mxu0 0.0
    %728 = vmatpush2.msra.mxu0 0.0
    %729 = vmatprep.mubr.f32.mxu0 0.0
    %730 = vmatmul.mubr.f32.gmra.mxu0 %v660
    %v731 = vpop.f32.mrf.mxu0
    %v732 = vadd.f32 0.0, %v731
    %v733 = vpop.f32.mrf.mxu0
    %734 = vmatprep.mubr.f32.mxu0 0.0
    %735 = vmatmul.mubr.f32.gmra.mxu0 %v663
    %v736 = vpop.f32.mrf.mxu0
    %v737 = vadd.f32 0.0, %v736
    %v738 = vpop.f32.mrf.mxu0
    %739 = vdwg.mxu0
    %v740 = vadd.f32 %v538, %v732
    %v741 = vadd.f32 %v543, %v737
    %742 = vrot.lane.b32.xlu0 %v136, 104
    %v743 = vpop.permute.xlu0 %742
    %744 = vrot.lane.b32.xlu0 %v142, 104
    %v745 = vpop.permute.xlu0 %744
    %746 = vrot.lane.b32.xlu0 %v136, 72
    %v747 = vpop.permute.xlu0 %746
    %748 = vrot.lane.b32.xlu0 %v142, 72
    %v749 = vpop.permute.xlu0 %748
    %v750 = vsel %vm152, %v743, 0
    %v752 = vsel %vm152, %v745, 0
    %v754 = vsel %vm152, %v747, 0
    %v756 = vsel %vm152, %v749, 0
    %758 = vmatprep.subr.mxu0 0.0
    %759 = vmatpush1.xpose.msra.mxu0 0.0
    %760 = vmatprep.subr.mxu0 0.0
    %761 = vmatpush1.xpose.msra.mxu0 0.0
    %762 = vmatprep.subr.mxu0 0.0
    %763 = vmatpush1.xpose.msra.mxu0 0.0
    %764 = vmatprep.subr.mxu0 0.0
    %765 = vmatpush1.xpose.msra.mxu0 0.0
    %766 = vmatprep.subr.mxu0 0.0
    %767 = vmatpush1.xpose.msra.mxu0 0.0
    %768 = vmatprep.subr.mxu0 0.0
    %769 = vmatpush1.xpose.msra.mxu0 0.0
    %770 = vmatprep.subr.mxu0 0.0
    %771 = vmatpush1.xpose.msra.mxu0 0.0
    %772 = vmatprep.subr.mxu0 0.0
    %773 = vmatpush1.xpose.msra.mxu0 0.0
    %774 = vmatprep.subr.mxu0 0.0
    %775 = vmatpush1.xpose.msra.mxu0 0.0
    %776 = vmatprep.subr.mxu0 0.0
    %777 = vmatpush1.xpose.msra.mxu0 0.0
    %778 = vmatprep.subr.mxu0 0.0
    %779 = vmatpush1.xpose.msra.mxu0 0.0
    %780 = vmatprep.subr.mxu0 0.0
    %781 = vmatpush1.xpose.msra.mxu0 0.0
    %782 = vmatprep.subr.mxu0 0.0
    %783 = vmatpush1.xpose.msra.mxu0 0.0
    %784 = vmatprep.subr.mxu0 0.0
    %785 = vmatpush1.xpose.msra.mxu0 0.0
    %786 = vmatprep.subr.mxu0 0.0
    %787 = vmatpush1.xpose.msra.mxu0 %v756
    %788 = vmatprep.subr.mxu0 0.0
    %789 = vmatpush1.xpose.msra.mxu0 %v754
    %790 = vmatprep.subr.mxu0 0.0
    %791 = vmatpush2.xpose.msra.mxu0 0.0
    %792 = vmatprep.subr.mxu0 0.0
    %793 = vmatpush2.xpose.msra.mxu0 0.0
    %794 = vmatprep.subr.mxu0 0.0
    %795 = vmatpush2.xpose.msra.mxu0 0.0
    %796 = vmatprep.subr.mxu0 0.0
    %797 = vmatpush2.xpose.msra.mxu0 0.0
    %798 = vmatprep.subr.mxu0 0.0
    %799 = vmatpush2.xpose.msra.mxu0 0.0
    %800 = vmatprep.subr.mxu0 0.0
    %801 = vmatpush2.xpose.msra.mxu0 0.0
    %802 = vmatprep.subr.mxu0 0.0
    %803 = vmatpush2.xpose.msra.mxu0 0.0
    %804 = vmatprep.subr.mxu0 0.0
    %805 = vmatpush2.xpose.msra.mxu0 0.0
    %806 = vmatprep.subr.mxu0 0.0
    %807 = vmatpush2.xpose.msra.mxu0 0.0
    %808 = vmatprep.subr.mxu0 0.0
    %809 = vmatpush2.xpose.msra.mxu0 0.0
    %810 = vmatprep.subr.mxu0 0.0
    %811 = vmatpush2.xpose.msra.mxu0 0.0
    %812 = vmatprep.subr.mxu0 0.0
    %813 = vmatpush2.xpose.msra.mxu0 0.0
    %814 = vmatprep.subr.mxu0 0.0
    %815 = vmatpush2.xpose.msra.mxu0 0.0
    %816 = vmatprep.subr.mxu0 0.0
    %817 = vmatpush2.xpose.msra.mxu0 0.0
    %818 = vmatprep.subr.mxu0 0.0
    %819 = vmatpush2.xpose.msra.mxu0 0.0
    %820 = vmatprep.subr.mxu0 0.0
    %821 = vmatpush2.xpose.msra.mxu0 0.0
    %822 = vmatprep.mubr.f32.mxu0 0.0
    %823 = vmatmul.mubr.f32.gmra.mxu0 %v750
    %v824 = vpop.f32.mrf.mxu0
    %v825 = vadd.f32 %v30, %v824
    %v826 = vpop.f32.mrf.mxu0
    %827 = vmatprep.mubr.f32.mxu0 0.0
    %828 = vmatmul.mubr.f32.gmra.mxu0 %v752
    %v829 = vpop.f32.mrf.mxu0
    %v830 = vadd.f32 %v31, %v829
    %v831 = vpop.f32.mrf.mxu0
    %832 = vdwg.mxu0
    %v833 = vsel %vm236, %v825, -inf
    %834 = vmax.xlane.f32.xlu0 %v833
    %v835 = vpop.xlane.xlu0 %834
    %v836 = vsel %vm236, %v830, -inf
    %837 = vmax.xlane.f32.xlu0 %v836
    %v838 = vpop.xlane.xlu0 %837
    %v839 = vsub.f32 %v825, %v835
    %v840 = vsub.f32 %v830, %v838
    %v841 = vmul.f32 %v839, 1.442695
    %v842 = vpow.pop %v841
    %v843 = vmul.f32 %v840, 1.442695
    %v844 = vpow.pop %v843
    %v845 = vsel %vm236, %v842, 0.0
    %846 = vadd.xlane.f32.xlu0 %v845
    %v847 = vpop.xlane.xlu0 %846
    %v848 = vsel %vm236, %v844, 0.0
    %849 = vadd.xlane.f32.xlu0 %v848
    %v850 = vpop.xlane.xlu0 %849
    %v851 = vrcp.pop %v847
    %v852 = vrcp.pop %v850
    %v853 = vmul.f32 %v842, %v851
    %v854 = vmul.f32 %v844, %v852
    %857 = vrot.lane.b32.xlu0 %v138, 96
    %v858 = vpop.permute.xlu0 %857
    %859 = vrot.lane.b32.xlu0 %v144, 96
    %v860 = vpop.permute.xlu0 %859
    %v864 = vsel %vm236, %v853, 0
    %v867 = vsel %vm236, %v854, 0
    %869 = vmatprep.subr.mxu0 0.0
    %870 = vmatpush1.msra.mxu0 0.0
    %871 = vmatprep.subr.mxu0 0.0
    %872 = vmatpush1.msra.mxu0 0.0
    %873 = vmatprep.subr.mxu0 0.0
    %874 = vmatpush1.msra.mxu0 0.0
    %875 = vmatprep.subr.mxu0 0.0
    %876 = vmatpush1.msra.mxu0 0.0
    %877 = vmatprep.subr.mxu0 0.0
    %878 = vmatpush1.msra.mxu0 0.0
    %879 = vmatprep.subr.mxu0 0.0
    %880 = vmatpush1.msra.mxu0 0.0
    %881 = vmatprep.subr.mxu0 0.0
    %882 = vmatpush1.msra.mxu0 0.0
    %883 = vmatprep.subr.mxu0 0.0
    %884 = vmatpush1.msra.mxu0 0.0
    %885 = vmatprep.subr.mxu0 0.0
    %886 = vmatpush1.msra.mxu0 0.0
    %887 = vmatprep.subr.mxu0 0.0
    %888 = vmatpush1.msra.mxu0 0.0
    %889 = vmatprep.subr.mxu0 0.0
    %890 = vmatpush1.msra.mxu0 0.0
    %891 = vmatprep.subr.mxu0 0.0
    %892 = vmatpush1.msra.mxu0 0.0
    %893 = vmatprep.subr.mxu0 0.0
    %894 = vmatpush1.msra.mxu0 0.0
    %895 = vmatprep.subr.mxu0 0.0
    %896 = vmatpush1.msra.mxu0 0.0
    %897 = vmatprep.subr.mxu0 0.0
    %898 = vmatpush1.msra.mxu0 %v860
    %899 = vmatprep.subr.mxu0 0.0
    %900 = vmatpush1.msra.mxu0 %v858
    %901 = vmatprep.subr.mxu0 0.0
    %902 = vmatpush2.msra.mxu0 0.0
    %903 = vmatprep.subr.mxu0 0.0
    %904 = vmatpush2.msra.mxu0 0.0
    %905 = vmatprep.subr.mxu0 0.0
    %906 = vmatpush2.msra.mxu0 0.0
    %907 = vmatprep.subr.mxu0 0.0
    %908 = vmatpush2.msra.mxu0 0.0
    %909 = vmatprep.subr.mxu0 0.0
    %910 = vmatpush2.msra.mxu0 0.0
    %911 = vmatprep.subr.mxu0 0.0
    %912 = vmatpush2.msra.mxu0 0.0
    %913 = vmatprep.subr.mxu0 0.0
    %914 = vmatpush2.msra.mxu0 0.0
    %915 = vmatprep.subr.mxu0 0.0
    %916 = vmatpush2.msra.mxu0 0.0
    %917 = vmatprep.subr.mxu0 0.0
    %918 = vmatpush2.msra.mxu0 0.0
    %919 = vmatprep.subr.mxu0 0.0
    %920 = vmatpush2.msra.mxu0 0.0
    %921 = vmatprep.subr.mxu0 0.0
    %922 = vmatpush2.msra.mxu0 0.0
    %923 = vmatprep.subr.mxu0 0.0
    %924 = vmatpush2.msra.mxu0 0.0
    %925 = vmatprep.subr.mxu0 0.0
    %926 = vmatpush2.msra.mxu0 0.0
    %927 = vmatprep.subr.mxu0 0.0
    %928 = vmatpush2.msra.mxu0 0.0
    %929 = vmatprep.subr.mxu0 0.0
    %930 = vmatpush2.msra.mxu0 0.0
    %931 = vmatprep.subr.mxu0 0.0
    %932 = vmatpush2.msra.mxu0 0.0
    %933 = vmatprep.mubr.f32.mxu0 0.0
    %934 = vmatmul.mubr.f32.gmra.mxu0 %v864
    %v935 = vpop.f32.mrf.mxu0
    %v936 = vadd.f32 0.0, %v935
    %v937 = vpop.f32.mrf.mxu0
    %938 = vmatprep.mubr.f32.mxu0 0.0
    %939 = vmatmul.mubr.f32.gmra.mxu0 %v867
    %v940 = vpop.f32.mrf.mxu0
    %v941 = vadd.f32 0.0, %v940
    %v942 = vpop.f32.mrf.mxu0
    %943 = vdwg.mxu0
    %v944 = vadd.f32 %v740, %v936
    %v945 = vadd.f32 %v741, %v941
    %v946 = vlaneseq
    %v947 = vshrl.u32 %v946, 7
    %v948 = vsub.s32 1, %v947
    %v949 = vrot.slane %v52, %v948
    %v950 = vadd.f32 %v944, %v949
    %v951 = vadd.f32 %v945, %v949
    %v952 = vadd.f32 %v18, %v950
    %v953 = vadd.f32 %v19, %v951
    %v954 = vsel %vm62, %v952, 0.0
    %955 = vadd.xlane.f32.xlu0 %v954
    %v956 = vpop.xlane.xlu0 %955
    %v957 = vsel %vm62, %v953, 0.0
    %958 = vadd.xlane.f32.xlu0 %v957
    %v959 = vpop.xlane.xlu0 %958
    %v960 = vrcp.pop 32.0
    %v961 = vmul.f32 %v956, %v960
    %v962 = vmul.f32 %v959, %v960
    %v963 = vsub.f32 %v952, %v961
    %v964 = vsub.f32 %v953, %v962
    %v965 = vmul.f32 %v963, %v963
    %v966 = vmul.f32 %v964, %v964
    %v967 = vsel %vm62, %v965, 0.0
    %968 = vadd.xlane.f32.xlu0 %v967
    %v969 = vpop.xlane.xlu0 %968
    %v970 = vsel %vm62, %v966, 0.0
    %971 = vadd.xlane.f32.xlu0 %v970
    %v972 = vpop.xlane.xlu0 %971
    %v973 = vmul.f32 %v969, %v960
    %v974 = vmul.f32 %v972, %v960
    %v975 = vadd.f32 %v973, 1e-05
    %v976 = vadd.f32 %v974, 1e-05
    %v977 = vrsqrt.pop %v975
    %v978 = vrsqrt.pop %v976
    %v979 = vmul.f32 %v963, %v977
    %v980 = vmul.f32 %v964, %v978
    %v981 = vlaneseq
    %v982 = vshrl.u32 %v981, 7
    %v983 = vsub.s32 2, %v982
    %v984 = vrot.slane %v52, %v983
    %v985 = vmul.f32 %v979, %v984
    %v986 = vmul.f32 %v980, %v984
    %v987 = vlaneseq
    %v988 = vshrl.u32 %v987, 7
    %v989 = vsub.s32 3, %v988
    %v990 = vrot.slane %v52, %v989
    %v991 = vadd.f32 %v985, %v990
    %v992 = vadd.f32 %v986, %v990
    %v993 = vlaneseq
    %v994 = vshrl.u32 %v993, 7
    %v995 = vsub.s32 6, %v994
    %v996 = vrot.slane %v52, %v995
    %v998 = vsel %vm62, %v991, 0
    %v1001 = vsel %vm62, %v992, 0
    %1003 = vmatprep.subr.mxu0 0.0
    %1004 = vmatpush1.msra.mxu0 0.0
    %1005 = vmatprep.subr.mxu0 0.0
    %1006 = vmatpush1.msra.mxu0 0.0
    %1007 = vmatprep.subr.mxu0 0.0
    %1008 = vmatpush1.msra.mxu0 0.0
    %1009 = vmatprep.subr.mxu0 0.0
    %1010 = vmatpush1.msra.mxu0 0.0
    %1011 = vmatprep.subr.mxu0 0.0
    %1012 = vmatpush1.msra.mxu0 0.0
    %1013 = vmatprep.subr.mxu0 0.0
    %1014 = vmatpush1.msra.mxu0 0.0
    %1015 = vmatprep.subr.mxu0 0.0
    %1016 = vmatpush1.msra.mxu0 0.0
    %1017 = vmatprep.subr.mxu0 0.0
    %1018 = vmatpush1.msra.mxu0 0.0
    %1019 = vmatprep.subr.mxu0 0.0
    %1020 = vmatpush1.msra.mxu0 0.0
    %1021 = vmatprep.subr.mxu0 0.0
    %1022 = vmatpush1.msra.mxu0 0.0
    %1023 = vmatprep.subr.mxu0 0.0
    %1024 = vmatpush1.msra.mxu0 0.0
    %1025 = vmatprep.subr.mxu0 0.0
    %1026 = vmatpush1.msra.mxu0 0.0
    %1027 = vmatprep.subr.mxu0 0.0
    %1028 = vmatpush1.msra.mxu0 %v43
    %1029 = vmatprep.subr.mxu0 0.0
    %1030 = vmatpush1.msra.mxu0 %v42
    %1031 = vmatprep.subr.mxu0 0.0
    %1032 = vmatpush1.msra.mxu0 %v41
    %1033 = vmatprep.subr.mxu0 0.0
    %1034 = vmatpush1.msra.mxu0 %v40
    %1035 = vmatprep.subr.mxu0 0.0
    %1036 = vmatpush2.msra.mxu0 0.0
    %1037 = vmatprep.subr.mxu0 0.0
    %1038 = vmatpush2.msra.mxu0 0.0
    %1039 = vmatprep.subr.mxu0 0.0
    %1040 = vmatpush2.msra.mxu0 0.0
    %1041 = vmatprep.subr.mxu0 0.0
    %1042 = vmatpush2.msra.mxu0 0.0
    %1043 = vmatprep.subr.mxu0 0.0
    %1044 = vmatpush2.msra.mxu0 0.0
    %1045 = vmatprep.subr.mxu0 0.0
    %1046 = vmatpush2.msra.mxu0 0.0
    %1047 = vmatprep.subr.mxu0 0.0
    %1048 = vmatpush2.msra.mxu0 0.0
    %1049 = vmatprep.subr.mxu0 0.0
    %1050 = vmatpush2.msra.mxu0 0.0
    %1051 = vmatprep.subr.mxu0 0.0
    %1052 = vmatpush2.msra.mxu0 0.0
    %1053 = vmatprep.subr.mxu0 0.0
    %1054 = vmatpush2.msra.mxu0 0.0
    %1055 = vmatprep.subr.mxu0 0.0
    %1056 = vmatpush2.msra.mxu0 0.0
    %1057 = vmatprep.subr.mxu0 0.0
    %1058 = vmatpush2.msra.mxu0 0.0
    %1059 = vmatprep.subr.mxu0 0.0
    %1060 = vmatpush2.msra.mxu0 0.0
    %1061 = vmatprep.subr.mxu0 0.0
    %1062 = vmatpush2.msra.mxu0 0.0
    %1063 = vmatprep.subr.mxu0 0.0
    %1064 = vmatpush2.msra.mxu0 0.0
    %1065 = vmatprep.subr.mxu0 0.0
    %1066 = vmatpush2.msra.mxu0 0.0
    %1067 = vmatprep.mubr.f32.mxu0 0.0
    %1068 = vmatmul.mubr.f32.gmra.mxu0 %v998
    %v1069 = vpop.f32.mrf.mxu0
    %v1070 = vadd.f32 %v996, %v1069
    %v1071 = vpop.f32.mrf.mxu0
    %1072 = vmatprep.mubr.f32.mxu0 0.0
    %1073 = vmatmul.mubr.f32.gmra.mxu0 %v1001
    %v1074 = vpop.f32.mrf.mxu0
    %v1075 = vadd.f32 %v996, %v1074
    %v1076 = vpop.f32.mrf.mxu0
    %1077 = vdwg.mxu0
    %v1078 = vmax.f32 %v1070, 0.0
    %v1079 = vmax.f32 %v1075, 0.0
    %v1080 = vlaneseq
    %v1081 = vshrl.u32 %v1080, 7
    %v1082 = vsub.s32 7, %v1081
    %v1083 = vrot.slane %v52, %v1082
    %vm1084 = vcmask 523264
    %v1086 = vsel %vm1084, %v1078, 0
    %v1089 = vsel %vm1084, %v1079, 0
    %1091 = vmatprep.subr.mxu0 0.0
    %1092 = vmatpush1.msra.mxu0 0.0
    %1093 = vmatprep.subr.mxu0 0.0
    %1094 = vmatpush1.msra.mxu0 0.0
    %1095 = vmatprep.subr.mxu0 0.0
    %1096 = vmatpush1.msra.mxu0 0.0
    %1097 = vmatprep.subr.mxu0 0.0
    %1098 = vmatpush1.msra.mxu0 0.0
    %1099 = vmatprep.subr.mxu0 0.0
    %1100 = vmatpush1.msra.mxu0 0.0
    %1101 = vmatprep.subr.mxu0 0.0
    %1102 = vmatpush1.msra.mxu0 0.0
    %1103 = vmatprep.subr.mxu0 0.0
    %1104 = vmatpush1.msra.mxu0 0.0
    %1105 = vmatprep.subr.mxu0 0.0
    %1106 = vmatpush1.msra.mxu0 0.0
    %1107 = vmatprep.subr.mxu0 0.0
    %1108 = vmatpush1.msra.mxu0 %v51
    %1109 = vmatprep.subr.mxu0 0.0
    %1110 = vmatpush1.msra.mxu0 %v50
    %1111 = vmatprep.subr.mxu0 0.0
    %1112 = vmatpush1.msra.mxu0 %v49
    %1113 = vmatprep.subr.mxu0 0.0
    %1114 = vmatpush1.msra.mxu0 %v48
    %1115 = vmatprep.subr.mxu0 0.0
    %1116 = vmatpush1.msra.mxu0 %v47
    %1117 = vmatprep.subr.mxu0 0.0
    %1118 = vmatpush1.msra.mxu0 %v46
    %1119 = vmatprep.subr.mxu0 0.0
    %1120 = vmatpush1.msra.mxu0 %v45
    %1121 = vmatprep.subr.mxu0 0.0
    %1122 = vmatpush1.msra.mxu0 %v44
    %1123 = vmatprep.subr.mxu0 0.0
    %1124 = vmatpush2.msra.mxu0 0.0
    %1125 = vmatprep.subr.mxu0 0.0
    %1126 = vmatpush2.msra.mxu0 0.0
    %1127 = vmatprep.subr.mxu0 0.0
    %1128 = vmatpush2.msra.mxu0 0.0
    %1129 = vmatprep.subr.mxu0 0.0
    %1130 = vmatpush2.msra.mxu0 0.0
    %1131 = vmatprep.subr.mxu0 0.0
    %1132 = vmatpush2.msra.mxu0 0.0
    %1133 = vmatprep.subr.mxu0 0.0
    %1134 = vmatpush2.msra.mxu0 0.0
    %1135 = vmatprep.subr.mxu0 0.0
    %1136 = vmatpush2.msra.mxu0 0.0
    %1137 = vmatprep.subr.mxu0 0.0
    %1138 = vmatpush2.msra.mxu0 0.0
    %1139 = vmatprep.subr.mxu0 0.0
    %1140 = vmatpush2.msra.mxu0 0.0
    %1141 = vmatprep.subr.mxu0 0.0
    %1142 = vmatpush2.msra.mxu0 0.0
    %1143 = vmatprep.subr.mxu0 0.0
    %1144 = vmatpush2.msra.mxu0 0.0
    %1145 = vmatprep.subr.mxu0 0.0
    %1146 = vmatpush2.msra.mxu0 0.0
    %1147 = vmatprep.subr.mxu0 0.0
    %1148 = vmatpush2.msra.mxu0 0.0
    %1149 = vmatprep.subr.mxu0 0.0
    %1150 = vmatpush2.msra.mxu0 0.0
    %1151 = vmatprep.subr.mxu0 0.0
    %1152 = vmatpush2.msra.mxu0 0.0
    %1153 = vmatprep.subr.mxu0 0.0
    %1154 = vmatpush2.msra.mxu0 0.0
    %1155 = vmatprep.mubr.f32.mxu0 0.0
    %1156 = vmatmul.mubr.f32.gmra.mxu0 %v1086
    %v1157 = vpop.f32.mrf.mxu0
    %v1158 = vadd.f32 %v1083, %v1157
    %v1159 = vpop.f32.mrf.mxu0
    %1160 = vmatprep.mubr.f32.mxu0 0.0
    %1161 = vmatmul.mubr.f32.gmra.mxu0 %v1089
    %v1162 = vpop.f32.mrf.mxu0
    %v1163 = vadd.f32 %v1083, %v1162
    %v1164 = vpop.f32.mrf.mxu0
    %1165 = vdwg.mxu0
    %v1166 = vadd.f32 %v991, %v1158
    %v1167 = vadd.f32 %v992, %v1163
    %v1168 = vsel %vm62, %v1166, 0.0
    %1169 = vadd.xlane.f32.xlu0 %v1168
    %v1170 = vpop.xlane.xlu0 %1169
    %v1171 = vsel %vm62, %v1167, 0.0
    %1172 = vadd.xlane.f32.xlu0 %v1171
    %v1173 = vpop.xlane.xlu0 %1172
    %v1174 = vmul.f32 %v1170, %v960
    %v1175 = vmul.f32 %v1173, %v960
    %v1176 = vsub.f32 %v1166, %v1174
    %v1177 = vsub.f32 %v1167, %v1175
    %v1178 = vmul.f32 %v1176, %v1176
    %v1179 = vmul.f32 %v1177, %v1177
    %v1180 = vsel %vm62, %v1178, 0.0
    %1181 = vadd.xlane.f32.xlu0 %v1180
    %v1182 = vpop.xlane.xlu0 %1181
    %v1183 = vsel %vm62, %v1179, 0.0
    %1184 = vadd.xlane.f32.xlu0 %v1183
    %v1185 = vpop.xlane.xlu0 %1184
    %v1186 = vmul.f32 %v1182, %v960
    %v1187 = vmul.f32 %v1185, %v960
    %v1188 = vadd.f32 %v1186, 1e-05
    %v1189 = vadd.f32 %v1187, 1e-05
    %v1190 = vrsqrt.pop %v1188
    %v1191 = vrsqrt.pop %v1189
    %v1192 = vmul.f32 %v1176, %v1190
    %v1193 = vmul.f32 %v1177, %v1191
    %v1194 = vlaneseq
    %v1195 = vshrl.u32 %v1194, 7
    %v1196 = vsub.s32 4, %v1195
    %v1197 = vrot.slane %v52, %v1196
    %v1198 = vmul.f32 %v1192, %v1197
    %v1199 = vmul.f32 %v1193, %v1197
    %v1200 = vlaneseq
    %v1201 = vshrl.u32 %v1200, 7
    %v1202 = vsub.s32 5, %v1201
    %v1203 = vrot.slane %v52, %v1202
    %v1204 = vadd.f32 %v1198, %v1203
    %v1205 = vadd.f32 %v1199, %v1203
    %s1206 = scalar_lea.vmem %s1, 64
    %v1207 = vld [vmem:[%s1206] sm:$0xff]
    %v1208 = vld [vmem:[%s1206 + $0x8] sm:$0xff]
    %v1209 = vld [vmem:[%s1206 + $0x10] sm:$0xff]
    %v1210 = vld [vmem:[%s1206 + $0x18] sm:$0xff]
    %v1211 = vld [vmem:[%s1206 + $0x20] sm:$0xff]
    %v1212 = vld [vmem:[%s1206 + $0x28] sm:$0xff]
    %v1213 = vld [vmem:[%s1206 + $0x30] sm:$0xff]
    %v1214 = vld [vmem:[%s1206 + $0x38] sm:$0xff]
    %s1215 = scalar_lea.vmem %s2, 96
    %v1216 = vld [vmem:[%s1215] sm:$0xff]
    %v1217 = vld [vmem:[%s1215 + $0x8] sm:$0xff]
    %v1218 = vld [vmem:[%s1215 + $0x10] sm:$0xff]
    %v1219 = vld [vmem:[%s1215 + $0x18] sm:$0xff]
    %v1220 = vld [vmem:[%s1215 + $0x20] sm:$0xff]
    %v1221 = vld [vmem:[%s1215 + $0x28] sm:$0xff]
    %v1222 = vld [vmem:[%s1215 + $0x30] sm:$0xff]
    %v1223 = vld [vmem:[%s1215 + $0x38] sm:$0xff]
    %v1224 = vld [vmem:[%s1215 + $0x40] sm:$0xff]
    %v1225 = vld [vmem:[%s1215 + $0x48] sm:$0xff]
    %v1226 = vld [vmem:[%s1215 + $0x50] sm:$0xff]
    %v1227 = vld [vmem:[%s1215 + $0x58] sm:$0xff]
    %s1228 = scalar_lea.vmem %s3, 16
    %v1229 = vld [vmem:[%s1228] sm:$0xff]
    %v1230 = vld [vmem:[%s1228 + $0x8] sm:$0xff]
    %v1231 = vlaneseq
    %v1232 = vshrl.u32 %v1231, 7
    %v1233 = vsub.s32 0, %v1232
    %v1234 = vrot.slane %v1229, %v1233
    %v1235 = vlaneseq
    %v1236 = vshrl.u32 %v1235, 7
    %v1237 = vsub.s32 0, %v1236
    %v1238 = vrot.slane %v1230, %v1237
    %v1240 = vsel %vm62, %v1204, 0
    %v1243 = vsel %vm62, %v1205, 0
    %1245 = vmatprep.subr.mxu0 0.0
    %1246 = vmatpush1.msra.mxu0 0.0
    %1247 = vmatprep.subr.mxu0 0.0
    %1248 = vmatpush1.msra.mxu0 0.0
    %1249 = vmatprep.subr.mxu0 0.0
    %1250 = vmatpush1.msra.mxu0 0.0
    %1251 = vmatprep.subr.mxu0 0.0
    %1252 = vmatpush1.msra.mxu0 0.0
    %1253 = vmatprep.subr.mxu0 0.0
    %1254 = vmatpush1.msra.mxu0 0.0
    %1255 = vmatprep.subr.mxu0 0.0
    %1256 = vmatpush1.msra.mxu0 0.0
    %1257 = vmatprep.subr.mxu0 0.0
    %1258 = vmatpush1.msra.mxu0 0.0
    %1259 = vmatprep.subr.mxu0 0.0
    %1260 = vmatpush1.msra.mxu0 0.0
    %1261 = vmatprep.subr.mxu0 0.0
    %1262 = vmatpush1.msra.mxu0 0.0
    %1263 = vmatprep.subr.mxu0 0.0
    %1264 = vmatpush1.msra.mxu0 0.0
    %1265 = vmatprep.subr.mxu0 0.0
    %1266 = vmatpush1.msra.mxu0 0.0
    %1267 = vmatprep.subr.mxu0 0.0
    %1268 = vmatpush1.msra.mxu0 0.0
    %1269 = vmatprep.subr.mxu0 %v1214
    %1270 = vmatpush1.msra.mxu0 %v1213
    %1271 = vmatprep.subr.mxu0 %v1212
    %1272 = vmatpush1.msra.mxu0 %v1211
    %1273 = vmatprep.subr.mxu0 %v1210
    %1274 = vmatpush1.msra.mxu0 %v1209
    %1275 = vmatprep.subr.mxu0 %v1208
    %1276 = vmatpush1.msra.mxu0 %v1207
    %1277 = vmatprep.subr.mxu0 0.0
    %1278 = vmatpush2.msra.mxu0 0.0
    %1279 = vmatprep.subr.mxu0 0.0
    %1280 = vmatpush2.msra.mxu0 0.0
    %1281 = vmatprep.subr.mxu0 0.0
    %1282 = vmatpush2.msra.mxu0 0.0
    %1283 = vmatprep.subr.mxu0 0.0
    %1284 = vmatpush2.msra.mxu0 0.0
    %1285 = vmatprep.subr.mxu0 0.0
    %1286 = vmatpush2.msra.mxu0 0.0
    %1287 = vmatprep.subr.mxu0 0.0
    %1288 = vmatpush2.msra.mxu0 0.0
    %1289 = vmatprep.subr.mxu0 0.0
    %1290 = vmatpush2.msra.mxu0 0.0
    %1291 = vmatprep.subr.mxu0 0.0
    %1292 = vmatpush2.msra.mxu0 0.0
    %1293 = vmatprep.subr.mxu0 0.0
    %1294 = vmatpush2.msra.mxu0 0.0
    %1295 = vmatprep.subr.mxu0 0.0
    %1296 = vmatpush2.msra.mxu0 0.0
    %1297 = vmatprep.subr.mxu0 0.0
    %1298 = vmatpush2.msra.mxu0 0.0
    %1299 = vmatprep.subr.mxu0 0.0
    %1300 = vmatpush2.msra.mxu0 0.0
    %1301 = vmatprep.subr.mxu0 0.0
    %1302 = vmatpush2.msra.mxu0 0.0
    %1303 = vmatprep.subr.mxu0 0.0
    %1304 = vmatpush2.msra.mxu0 0.0
    %1305 = vmatprep.subr.mxu0 0.0
    %1306 = vmatpush2.msra.mxu0 0.0
    %1307 = vmatprep.subr.mxu0 0.0
    %1308 = vmatpush2.msra.mxu0 0.0
    %1309 = vmatprep.mubr.f32.mxu0 0.0
    %1310 = vmatmul.mubr.f32.gmra.mxu0 %v1240
    %v1311 = vpop.f32.mrf.mxu0
    %v1312 = vadd.f32 %v1234, %v1311
    %v1313 = vpop.f32.mrf.mxu0
    %v1314 = vadd.f32 %v1238, %v1313
    %1315 = vmatprep.mubr.f32.mxu0 0.0
    %1316 = vmatmul.mubr.f32.gmra.mxu0 %v1243
    %v1317 = vpop.f32.mrf.mxu0
    %v1318 = vadd.f32 %v1234, %v1317
    %v1319 = vpop.f32.mrf.mxu0
    %v1320 = vadd.f32 %v1238, %v1319
    %1321 = vdwg.mxu0
    %1324 = vrot.lane.b32.xlu0 %v1312, 96
    %v1325 = vpop.permute.xlu0 %1324
    %1326 = vrot.lane.b32.xlu0 %v1318, 96
    %v1327 = vpop.permute.xlu0 %1326
    %v1328 = vsel %vm152, %v1312, 0
    %v1330 = vsel %vm152, %v1318, 0
    %v1332 = vsel %vm152, %v1325, 0
    %v1334 = vsel %vm152, %v1327, 0
    %1336 = vmatprep.subr.mxu0 0.0
    %1337 = vmatpush1.xpose.msra.mxu0 0.0
    %1338 = vmatprep.subr.mxu0 0.0
    %1339 = vmatpush1.xpose.msra.mxu0 0.0
    %1340 = vmatprep.subr.mxu0 0.0
    %1341 = vmatpush1.xpose.msra.mxu0 0.0
    %1342 = vmatprep.subr.mxu0 0.0
    %1343 = vmatpush1.xpose.msra.mxu0 0.0
    %1344 = vmatprep.subr.mxu0 0.0
    %1345 = vmatpush1.xpose.msra.mxu0 0.0
    %1346 = vmatprep.subr.mxu0 0.0
    %1347 = vmatpush1.xpose.msra.mxu0 0.0
    %1348 = vmatprep.subr.mxu0 0.0
    %1349 = vmatpush1.xpose.msra.mxu0 0.0
    %1350 = vmatprep.subr.mxu0 0.0
    %1351 = vmatpush1.xpose.msra.mxu0 0.0
    %1352 = vmatprep.subr.mxu0 0.0
    %1353 = vmatpush1.xpose.msra.mxu0 0.0
    %1354 = vmatprep.subr.mxu0 0.0
    %1355 = vmatpush1.xpose.msra.mxu0 0.0
    %1356 = vmatprep.subr.mxu0 0.0
    %1357 = vmatpush1.xpose.msra.mxu0 0.0
    %1358 = vmatprep.subr.mxu0 0.0
    %1359 = vmatpush1.xpose.msra.mxu0 0.0
    %1360 = vmatprep.subr.mxu0 0.0
    %1361 = vmatpush1.xpose.msra.mxu0 0.0
    %1362 = vmatprep.subr.mxu0 0.0
    %1363 = vmatpush1.xpose.msra.mxu0 0.0
    %1364 = vmatprep.subr.mxu0 0.0
    %1365 = vmatpush1.xpose.msra.mxu0 %v1334
    %1366 = vmatprep.subr.mxu0 0.0
    %1367 = vmatpush1.xpose.msra.mxu0 %v1332
    %1368 = vmatprep.subr.mxu0 0.0
    %1369 = vmatpush2.xpose.msra.mxu0 0.0
    %1370 = vmatprep.subr.mxu0 0.0
    %1371 = vmatpush2.xpose.msra.mxu0 0.0
    %1372 = vmatprep.subr.mxu0 0.0
    %1373 = vmatpush2.xpose.msra.mxu0 0.0
    %1374 = vmatprep.subr.mxu0 0.0
    %1375 = vmatpush2.xpose.msra.mxu0 0.0
    %1376 = vmatprep.subr.mxu0 0.0
    %1377 = vmatpush2.xpose.msra.mxu0 0.0
    %1378 = vmatprep.subr.mxu0 0.0
    %1379 = vmatpush2.xpose.msra.mxu0 0.0
    %1380 = vmatprep.subr.mxu0 0.0
    %1381 = vmatpush2.xpose.msra.mxu0 0.0
    %1382 = vmatprep.subr.mxu0 0.0
    %1383 = vmatpush2.xpose.msra.mxu0 0.0
    %1384 = vmatprep.subr.mxu0 0.0
    %1385 = vmatpush2.xpose.msra.mxu0 0.0
    %1386 = vmatprep.subr.mxu0 0.0
    %1387 = vmatpush2.xpose.msra.mxu0 0.0
    %1388 = vmatprep.subr.mxu0 0.0
    %1389 = vmatpush2.xpose.msra.mxu0 0.0
    %1390 = vmatprep.subr.mxu0 0.0
    %1391 = vmatpush2.xpose.msra.mxu0 0.0
    %1392 = vmatprep.subr.mxu0 0.0
    %1393 = vmatpush2.xpose.msra.mxu0 0.0
    %1394 = vmatprep.subr.mxu0 0.0
    %1395 = vmatpush2.xpose.msra.mxu0 0.0
    %1396 = vmatprep.subr.mxu0 0.0
    %1397 = vmatpush2.xpose.msra.mxu0 0.0
    %1398 = vmatprep.subr.mxu0 0.0
    %1399 = vmatpush2.xpose.msra.mxu0 0.0
    %1400 = vmatprep.mubr.f32.mxu0 0.0
    %1401 = vmatmul.mubr.f32.gmra.mxu0 %v1328
    %v1402 = vpop.f32.mrf.mxu0
    %v1403 = vadd.f32 %v30, %v1402
    %v1404 = vpop.f32.mrf.mxu0
    %1405 = vmatprep.mubr.f32.mxu0 0.0
    %1406 = vmatmul.mubr.f32.gmra.mxu0 %v1330
    %v1407 = vpop.f32.mrf.mxu0
    %v1408 = vadd.f32 %v31, %v1407
    %v1409 = vpop.f32.mrf.mxu0
    %1410 = vdwg.mxu0
    %v1411 = vsel %vm236, %v1403, -inf
    %1412 = vmax.xlane.f32.xlu0 %v1411
    %v1413 = vpop.xlane.xlu0 %1412
    %v1414 = vsel %vm236, %v1408, -inf
    %1415 = vmax.xlane.f32.xlu0 %v1414
    %v1416 = vpop.xlane.xlu0 %1415
    %v1417 = vsub.f32 %v1403, %v1413
    %v1418 = vsub.f32 %v1408, %v1416
    %v1419 = vmul.f32 %v1417, 1.442695
    %v1420 = vpow.pop %v1419
    %v1421 = vmul.f32 %v1418, 1.442695
    %v1422 = vpow.pop %v1421
    %v1423 = vsel %vm236, %v1420, 0.0
    %1424 = vadd.xlane.f32.xlu0 %v1423
    %v1425 = vpop.xlane.xlu0 %1424
    %v1426 = vsel %vm236, %v1422, 0.0
    %1427 = vadd.xlane.f32.xlu0 %v1426
    %v1428 = vpop.xlane.xlu0 %1427
    %v1429 = vrcp.pop %v1425
    %v1430 = vrcp.pop %v1428
    %v1431 = vmul.f32 %v1420, %v1429
    %v1432 = vmul.f32 %v1422, %v1430
    %1433 = vrot.lane.b32.xlu0 %v1312, 120
    %v1434 = vpop.permute.xlu0 %1433
    %1435 = vrot.lane.b32.xlu0 %v1318, 120
    %v1436 = vpop.permute.xlu0 %1435
    %1437 = vrot.lane.b32.xlu0 %v1312, 88
    %v1438 = vpop.permute.xlu0 %1437
    %1439 = vrot.lane.b32.xlu0 %v1318, 88
    %v1440 = vpop.permute.xlu0 %1439
    %v1441 = vsel %vm152, %v1434, 0
    %v1443 = vsel %vm152, %v1436, 0
    %v1445 = vsel %vm152, %v1438, 0
    %v1447 = vsel %vm152, %v1440, 0
    %1449 = vmatprep.subr.mxu0 0.0
    %1450 = vmatpush1.xpose.msra.mxu0 0.0
    %1451 = vmatprep.subr.mxu0 0.0
    %1452 = vmatpush1.xpose.msra.mxu0 0.0
    %1453 = vmatprep.subr.mxu0 0.0
    %1454 = vmatpush1.xpose.msra.mxu0 0.0
    %1455 = vmatprep.subr.mxu0 0.0
    %1456 = vmatpush1.xpose.msra.mxu0 0.0
    %1457 = vmatprep.subr.mxu0 0.0
    %1458 = vmatpush1.xpose.msra.mxu0 0.0
    %1459 = vmatprep.subr.mxu0 0.0
    %1460 = vmatpush1.xpose.msra.mxu0 0.0
    %1461 = vmatprep.subr.mxu0 0.0
    %1462 = vmatpush1.xpose.msra.mxu0 0.0
    %1463 = vmatprep.subr.mxu0 0.0
    %1464 = vmatpush1.xpose.msra.mxu0 0.0
    %1465 = vmatprep.subr.mxu0 0.0
    %1466 = vmatpush1.xpose.msra.mxu0 0.0
    %1467 = vmatprep.subr.mxu0 0.0
    %1468 = vmatpush1.xpose.msra.mxu0 0.0
    %1469 = vmatprep.subr.mxu0 0.0
    %1470 = vmatpush1.xpose.msra.mxu0 0.0
    %1471 = vmatprep.subr.mxu0 0.0
    %1472 = vmatpush1.xpose.msra.mxu0 0.0
    %1473 = vmatprep.subr.mxu0 0.0
    %1474 = vmatpush1.xpose.msra.mxu0 0.0
    %1475 = vmatprep.subr.mxu0 0.0
    %1476 = vmatpush1.xpose.msra.mxu0 0.0
    %1477 = vmatprep.subr.mxu0 0.0
    %1478 = vmatpush1.xpose.msra.mxu0 %v1447
    %1479 = vmatprep.subr.mxu0 0.0
    %1480 = vmatpush1.xpose.msra.mxu0 %v1445
    %1481 = vmatprep.subr.mxu0 0.0
    %1482 = vmatpush2.xpose.msra.mxu0 0.0
    %1483 = vmatprep.subr.mxu0 0.0
    %1484 = vmatpush2.xpose.msra.mxu0 0.0
    %1485 = vmatprep.subr.mxu0 0.0
    %1486 = vmatpush2.xpose.msra.mxu0 0.0
    %1487 = vmatprep.subr.mxu0 0.0
    %1488 = vmatpush2.xpose.msra.mxu0 0.0
    %1489 = vmatprep.subr.mxu0 0.0
    %1490 = vmatpush2.xpose.msra.mxu0 0.0
    %1491 = vmatprep.subr.mxu0 0.0
    %1492 = vmatpush2.xpose.msra.mxu0 0.0
    %1493 = vmatprep.subr.mxu0 0.0
    %1494 = vmatpush2.xpose.msra.mxu0 0.0
    %1495 = vmatprep.subr.mxu0 0.0
    %1496 = vmatpush2.xpose.msra.mxu0 0.0
    %1497 = vmatprep.subr.mxu0 0.0
    %1498 = vmatpush2.xpose.msra.mxu0 0.0
    %1499 = vmatprep.subr.mxu0 0.0
    %1500 = vmatpush2.xpose.msra.mxu0 0.0
    %1501 = vmatprep.subr.mxu0 0.0
    %1502 = vmatpush2.xpose.msra.mxu0 0.0
    %1503 = vmatprep.subr.mxu0 0.0
    %1504 = vmatpush2.xpose.msra.mxu0 0.0
    %1505 = vmatprep.subr.mxu0 0.0
    %1506 = vmatpush2.xpose.msra.mxu0 0.0
    %1507 = vmatprep.subr.mxu0 0.0
    %1508 = vmatpush2.xpose.msra.mxu0 0.0
    %1509 = vmatprep.subr.mxu0 0.0
    %1510 = vmatpush2.xpose.msra.mxu0 0.0
    %1511 = vmatprep.subr.mxu0 0.0
    %1512 = vmatpush2.xpose.msra.mxu0 0.0
    %1513 = vmatprep.mubr.f32.mxu0 0.0
    %1514 = vmatmul.mubr.f32.gmra.mxu0 %v1441
    %v1515 = vpop.f32.mrf.mxu0
    %v1516 = vadd.f32 %v30, %v1515
    %v1517 = vpop.f32.mrf.mxu0
    %1518 = vmatprep.mubr.f32.mxu0 0.0
    %1519 = vmatmul.mubr.f32.gmra.mxu0 %v1443
    %v1520 = vpop.f32.mrf.mxu0
    %v1521 = vadd.f32 %v31, %v1520
    %v1522 = vpop.f32.mrf.mxu0
    %1523 = vdwg.mxu0
    %v1524 = vsel %vm236, %v1516, -inf
    %1525 = vmax.xlane.f32.xlu0 %v1524
    %v1526 = vpop.xlane.xlu0 %1525
    %v1527 = vsel %vm236, %v1521, -inf
    %1528 = vmax.xlane.f32.xlu0 %v1527
    %v1529 = vpop.xlane.xlu0 %1528
    %v1530 = vsub.f32 %v1516, %v1526
    %v1531 = vsub.f32 %v1521, %v1529
    %v1532 = vmul.f32 %v1530, 1.442695
    %v1533 = vpow.pop %v1532
    %v1534 = vmul.f32 %v1531, 1.442695
    %v1535 = vpow.pop %v1534
    %v1536 = vsel %vm236, %v1533, 0.0
    %1537 = vadd.xlane.f32.xlu0 %v1536
    %v1538 = vpop.xlane.xlu0 %1537
    %v1539 = vsel %vm236, %v1535, 0.0
    %1540 = vadd.xlane.f32.xlu0 %v1539
    %v1541 = vpop.xlane.xlu0 %1540
    %v1542 = vrcp.pop %v1538
    %v1543 = vrcp.pop %v1541
    %v1544 = vmul.f32 %v1533, %v1542
    %v1545 = vmul.f32 %v1535, %v1543
    %1546 = vrot.lane.b32.xlu0 %v1312, 32
    %v1547 = vpop.permute.xlu0 %1546
    %1548 = vrot.lane.b32.xlu0 %v1318, 32
    %v1549 = vpop.permute.xlu0 %1548
    %v1553 = vsel %vm236, %v1544, 0
    %v1556 = vsel %vm236, %v1545, 0
    %1558 = vmatprep.subr.mxu0 0.0
    %1559 = vmatpush1.msra.mxu0 0.0
    %1560 = vmatprep.subr.mxu0 0.0
    %1561 = vmatpush1.msra.mxu0 0.0
    %1562 = vmatprep.subr.mxu0 0.0
    %1563 = vmatpush1.msra.mxu0 0.0
    %1564 = vmatprep.subr.mxu0 0.0
    %1565 = vmatpush1.msra.mxu0 0.0
    %1566 = vmatprep.subr.mxu0 0.0
    %1567 = vmatpush1.msra.mxu0 0.0
    %1568 = vmatprep.subr.mxu0 0.0
    %1569 = vmatpush1.msra.mxu0 0.0
    %1570 = vmatprep.subr.mxu0 0.0
    %1571 = vmatpush1.msra.mxu0 0.0
    %1572 = vmatprep.subr.mxu0 0.0
    %1573 = vmatpush1.msra.mxu0 0.0
    %1574 = vmatprep.subr.mxu0 0.0
    %1575 = vmatpush1.msra.mxu0 0.0
    %1576 = vmatprep.subr.mxu0 0.0
    %1577 = vmatpush1.msra.mxu0 0.0
    %1578 = vmatprep.subr.mxu0 0.0
    %1579 = vmatpush1.msra.mxu0 0.0
    %1580 = vmatprep.subr.mxu0 0.0
    %1581 = vmatpush1.msra.mxu0 0.0
    %1582 = vmatprep.subr.mxu0 0.0
    %1583 = vmatpush1.msra.mxu0 0.0
    %1584 = vmatprep.subr.mxu0 0.0
    %1585 = vmatpush1.msra.mxu0 0.0
    %1586 = vmatprep.subr.mxu0 0.0
    %1587 = vmatpush1.msra.mxu0 %v1549
    %1588 = vmatprep.subr.mxu0 0.0
    %1589 = vmatpush1.msra.mxu0 %v1547
    %1590 = vmatprep.subr.mxu0 0.0
    %1591 = vmatpush2.msra.mxu0 0.0
    %1592 = vmatprep.subr.mxu0 0.0
    %1593 = vmatpush2.msra.mxu0 0.0
    %1594 = vmatprep.subr.mxu0 0.0
    %1595 = vmatpush2.msra.mxu0 0.0
    %1596 = vmatprep.subr.mxu0 0.0
    %1597 = vmatpush2.msra.mxu0 0.0
    %1598 = vmatprep.subr.mxu0 0.0
    %1599 = vmatpush2.msra.mxu0 0.0
    %1600 = vmatprep.subr.mxu0 0.0
    %1601 = vmatpush2.msra.mxu0 0.0
    %1602 = vmatprep.subr.mxu0 0.0
    %1603 = vmatpush2.msra.mxu0 0.0
    %1604 = vmatprep.subr.mxu0 0.0
    %1605 = vmatpush2.msra.mxu0 0.0
    %1606 = vmatprep.subr.mxu0 0.0
    %1607 = vmatpush2.msra.mxu0 0.0
    %1608 = vmatprep.subr.mxu0 0.0
    %1609 = vmatpush2.msra.mxu0 0.0
    %1610 = vmatprep.subr.mxu0 0.0
    %1611 = vmatpush2.msra.mxu0 0.0
    %1612 = vmatprep.subr.mxu0 0.0
    %1613 = vmatpush2.msra.mxu0 0.0
    %1614 = vmatprep.subr.mxu0 0.0
    %1615 = vmatpush2.msra.mxu0 0.0
    %1616 = vmatprep.subr.mxu0 0.0
    %1617 = vmatpush2.msra.mxu0 0.0
    %1618 = vmatprep.subr.mxu0 0.0
    %1619 = vmatpush2.msra.mxu0 0.0
    %1620 = vmatprep.subr.mxu0 0.0
    %1621 = vmatpush2.msra.mxu0 0.0
    %1622 = vmatprep.mubr.f32.mxu0 0.0
    %1623 = vmatmul.mubr.f32.gmra.mxu0 %v1553
    %v1624 = vpop.f32.mrf.mxu0
    %v1625 = vadd.f32 0.0, %v1624
    %v1626 = vpop.f32.mrf.mxu0
    %1627 = vmatprep.mubr.f32.mxu0 0.0
    %1628 = vmatmul.mubr.f32.gmra.mxu0 %v1556
    %v1629 = vpop.f32.mrf.mxu0
    %v1630 = vadd.f32 0.0, %v1629
    %v1631 = vpop.f32.mrf.mxu0
    %1632 = vdwg.mxu0
    %1633 = vrot.lane.b32.xlu0 %v1312, 64
    %v1634 = vpop.permute.xlu0 %1633
    %1635 = vrot.lane.b32.xlu0 %v1318, 64
    %v1636 = vpop.permute.xlu0 %1635
    %v1640 = vsel %vm236, %v1431, 0
    %v1643 = vsel %vm236, %v1432, 0
    %1645 = vmatprep.subr.mxu0 0.0
    %1646 = vmatpush1.msra.mxu0 0.0
    %1647 = vmatprep.subr.mxu0 0.0
    %1648 = vmatpush1.msra.mxu0 0.0
    %1649 = vmatprep.subr.mxu0 0.0
    %1650 = vmatpush1.msra.mxu0 0.0
    %1651 = vmatprep.subr.mxu0 0.0
    %1652 = vmatpush1.msra.mxu0 0.0
    %1653 = vmatprep.subr.mxu0 0.0
    %1654 = vmatpush1.msra.mxu0 0.0
    %1655 = vmatprep.subr.mxu0 0.0
    %1656 = vmatpush1.msra.mxu0 0.0
    %1657 = vmatprep.subr.mxu0 0.0
    %1658 = vmatpush1.msra.mxu0 0.0
    %1659 = vmatprep.subr.mxu0 0.0
    %1660 = vmatpush1.msra.mxu0 0.0
    %1661 = vmatprep.subr.mxu0 0.0
    %1662 = vmatpush1.msra.mxu0 0.0
    %1663 = vmatprep.subr.mxu0 0.0
    %1664 = vmatpush1.msra.mxu0 0.0
    %1665 = vmatprep.subr.mxu0 0.0
    %1666 = vmatpush1.msra.mxu0 0.0
    %1667 = vmatprep.subr.mxu0 0.0
    %1668 = vmatpush1.msra.mxu0 0.0
    %1669 = vmatprep.subr.mxu0 0.0
    %1670 = vmatpush1.msra.mxu0 0.0
    %1671 = vmatprep.subr.mxu0 0.0
    %1672 = vmatpush1.msra.mxu0 0.0
    %1673 = vmatprep.subr.mxu0 0.0
    %1674 = vmatpush1.msra.mxu0 %v1636
    %1675 = vmatprep.subr.mxu0 0.0
    %1676 = vmatpush1.msra.mxu0 %v1634
    %1677 = vmatprep.subr.mxu0 0.0
    %1678 = vmatpush2.msra.mxu0 0.0
    %1679 = vmatprep.subr.mxu0 0.0
    %1680 = vmatpush2.msra.mxu0 0.0
    %1681 = vmatprep.subr.mxu0 0.0
    %1682 = vmatpush2.msra.mxu0 0.0
    %1683 = vmatprep.subr.mxu0 0.0
    %1684 = vmatpush2.msra.mxu0 0.0
    %1685 = vmatprep.subr.mxu0 0.0
    %1686 = vmatpush2.msra.mxu0 0.0
    %1687 = vmatprep.subr.mxu0 0.0
    %1688 = vmatpush2.msra.mxu0 0.0
    %1689 = vmatprep.subr.mxu0 0.0
    %1690 = vmatpush2.msra.mxu0 0.0
    %1691 = vmatprep.subr.mxu0 0.0
    %1692 = vmatpush2.msra.mxu0 0.0
    %1693 = vmatprep.subr.mxu0 0.0
    %1694 = vmatpush2.msra.mxu0 0.0
    %1695 = vmatprep.subr.mxu0 0.0
    %1696 = vmatpush2.msra.mxu0 0.0
    %1697 = vmatprep.subr.mxu0 0.0
    %1698 = vmatpush2.msra.mxu0 0.0
    %1699 = vmatprep.subr.mxu0 0.0
    %1700 = vmatpush2.msra.mxu0 0.0
    %1701 = vmatprep.subr.mxu0 0.0
    %1702 = vmatpush2.msra.mxu0 0.0
    %1703 = vmatprep.subr.mxu0 0.0
    %1704 = vmatpush2.msra.mxu0 0.0
    %1705 = vmatprep.subr.mxu0 0.0
    %1706 = vmatpush2.msra.mxu0 0.0
    %1707 = vmatprep.subr.mxu0 0.0
    %1708 = vmatpush2.msra.mxu0 0.0
    %1709 = vmatprep.mubr.f32.mxu0 0.0
    %1710 = vmatmul.mubr.f32.gmra.mxu0 %v1640
    %v1711 = vpop.f32.mrf.mxu0
    %v1712 = vadd.f32 %v1625, %v1711
    %v1713 = vpop.f32.mrf.mxu0
    %1714 = vmatprep.mubr.f32.mxu0 0.0
    %1715 = vmatmul.mubr.f32.gmra.mxu0 %v1643
    %v1716 = vpop.f32.mrf.mxu0
    %v1717 = vadd.f32 %v1630, %v1716
    %v1718 = vpop.f32.mrf.mxu0
    %1719 = vdwg.mxu0
    %1720 = vrot.lane.b32.xlu0 %v1312, 112
    %v1721 = vpop.permute.xlu0 %1720
    %1722 = vrot.lane.b32.xlu0 %v1318, 112
    %v1723 = vpop.permute.xlu0 %1722
    %1724 = vrot.lane.b32.xlu0 %v1312, 80
    %v1725 = vpop.permute.xlu0 %1724
    %1726 = vrot.lane.b32.xlu0 %v1318, 80
    %v1727 = vpop.permute.xlu0 %1726
    %v1728 = vsel %vm152, %v1721, 0
    %v1730 = vsel %vm152, %v1723, 0
    %v1732 = vsel %vm152, %v1725, 0
    %v1734 = vsel %vm152, %v1727, 0
    %1736 = vmatprep.subr.mxu0 0.0
    %1737 = vmatpush1.xpose.msra.mxu0 0.0
    %1738 = vmatprep.subr.mxu0 0.0
    %1739 = vmatpush1.xpose.msra.mxu0 0.0
    %1740 = vmatprep.subr.mxu0 0.0
    %1741 = vmatpush1.xpose.msra.mxu0 0.0
    %1742 = vmatprep.subr.mxu0 0.0
    %1743 = vmatpush1.xpose.msra.mxu0 0.0
    %1744 = vmatprep.subr.mxu0 0.0
    %1745 = vmatpush1.xpose.msra.mxu0 0.0
    %1746 = vmatprep.subr.mxu0 0.0
    %1747 = vmatpush1.xpose.msra.mxu0 0.0
    %1748 = vmatprep.subr.mxu0 0.0
    %1749 = vmatpush1.xpose.msra.mxu0 0.0
    %1750 = vmatprep.subr.mxu0 0.0
    %1751 = vmatpush1.xpose.msra.mxu0 0.0
    %1752 = vmatprep.subr.mxu0 0.0
    %1753 = vmatpush1.xpose.msra.mxu0 0.0
    %1754 = vmatprep.subr.mxu0 0.0
    %1755 = vmatpush1.xpose.msra.mxu0 0.0
    %1756 = vmatprep.subr.mxu0 0.0
    %1757 = vmatpush1.xpose.msra.mxu0 0.0
    %1758 = vmatprep.subr.mxu0 0.0
    %1759 = vmatpush1.xpose.msra.mxu0 0.0
    %1760 = vmatprep.subr.mxu0 0.0
    %1761 = vmatpush1.xpose.msra.mxu0 0.0
    %1762 = vmatprep.subr.mxu0 0.0
    %1763 = vmatpush1.xpose.msra.mxu0 0.0
    %1764 = vmatprep.subr.mxu0 0.0
    %1765 = vmatpush1.xpose.msra.mxu0 %v1734
    %1766 = vmatprep.subr.mxu0 0.0
    %1767 = vmatpush1.xpose.msra.mxu0 %v1732
    %1768 = vmatprep.subr.mxu0 0.0
    %1769 = vmatpush2.xpose.msra.mxu0 0.0
    %1770 = vmatprep.subr.mxu0 0.0
    %1771 = vmatpush2.xpose.msra.mxu0 0.0
    %1772 = vmatprep.subr.mxu0 0.0
    %1773 = vmatpush2.xpose.msra.mxu0 0.0
    %1774 = vmatprep.subr.mxu0 0.0
    %1775 = vmatpush2.xpose.msra.mxu0 0.0
    %1776 = vmatprep.subr.mxu0 0.0
    %1777 = vmatpush2.xpose.msra.mxu0 0.0
    %1778 = vmatprep.subr.mxu0 0.0
    %1779 = vmatpush2.xpose.msra.mxu0 0.0
    %1780 = vmatprep.subr.mxu0 0.0
    %1781 = vmatpush2.xpose.msra.mxu0 0.0
    %1782 = vmatprep.subr.mxu0 0.0
    %1783 = vmatpush2.xpose.msra.mxu0 0.0
    %1784 = vmatprep.subr.mxu0 0.0
    %1785 = vmatpush2.xpose.msra.mxu0 0.0
    %1786 = vmatprep.subr.mxu0 0.0
    %1787 = vmatpush2.xpose.msra.mxu0 0.0
    %1788 = vmatprep.subr.mxu0 0.0
    %1789 = vmatpush2.xpose.msra.mxu0 0.0
    %1790 = vmatprep.subr.mxu0 0.0
    %1791 = vmatpush2.xpose.msra.mxu0 0.0
    %1792 = vmatprep.subr.mxu0 0.0
    %1793 = vmatpush2.xpose.msra.mxu0 0.0
    %1794 = vmatprep.subr.mxu0 0.0
    %1795 = vmatpush2.xpose.msra.mxu0 0.0
    %1796 = vmatprep.subr.mxu0 0.0
    %1797 = vmatpush2.xpose.msra.mxu0 0.0
    %1798 = vmatprep.subr.mxu0 0.0
    %1799 = vmatpush2.xpose.msra.mxu0 0.0
    %1800 = vmatprep.mubr.f32.mxu0 0.0
    %1801 = vmatmul.mubr.f32.gmra.mxu0 %v1728
    %v1802 = vpop.f32.mrf.mxu0
    %v1803 = vadd.f32 %v30, %v1802
    %v1804 = vpop.f32.mrf.mxu0
    %1805 = vmatprep.mubr.f32.mxu0 0.0
    %1806 = vmatmul.mubr.f32.gmra.mxu0 %v1730
    %v1807 = vpop.f32.mrf.mxu0
    %v1808 = vadd.f32 %v31, %v1807
    %v1809 = vpop.f32.mrf.mxu0
    %1810 = vdwg.mxu0
    %v1811 = vsel %vm236, %v1803, -inf
    %1812 = vmax.xlane.f32.xlu0 %v1811
    %v1813 = vpop.xlane.xlu0 %1812
    %v1814 = vsel %vm236, %v1808, -inf
    %1815 = vmax.xlane.f32.xlu0 %v1814
    %v1816 = vpop.xlane.xlu0 %1815
    %v1817 = vsub.f32 %v1803, %v1813
    %v1818 = vsub.f32 %v1808, %v1816
    %v1819 = vmul.f32 %v1817, 1.442695
    %v1820 = vpow.pop %v1819
    %v1821 = vmul.f32 %v1818, 1.442695
    %v1822 = vpow.pop %v1821
    %v1823 = vsel %vm236, %v1820, 0.0
    %1824 = vadd.xlane.f32.xlu0 %v1823
    %v1825 = vpop.xlane.xlu0 %1824
    %v1826 = vsel %vm236, %v1822, 0.0
    %1827 = vadd.xlane.f32.xlu0 %v1826
    %v1828 = vpop.xlane.xlu0 %1827
    %v1829 = vrcp.pop %v1825
    %v1830 = vrcp.pop %v1828
    %v1831 = vmul.f32 %v1820, %v1829
    %v1832 = vmul.f32 %v1822, %v1830
    %v1834 = vsel %vm236, %v1831, 0
    %v1837 = vsel %vm236, %v1832, 0
    %1839 = vmatprep.subr.mxu0 0.0
    %1840 = vmatpush1.msra.mxu0 0.0
    %1841 = vmatprep.subr.mxu0 0.0
    %1842 = vmatpush1.msra.mxu0 0.0
    %1843 = vmatprep.subr.mxu0 0.0
    %1844 = vmatpush1.msra.mxu0 0.0
    %1845 = vmatprep.subr.mxu0 0.0
    %1846 = vmatpush1.msra.mxu0 0.0
    %1847 = vmatprep.subr.mxu0 0.0
    %1848 = vmatpush1.msra.mxu0 0.0
    %1849 = vmatprep.subr.mxu0 0.0
    %1850 = vmatpush1.msra.mxu0 0.0
    %1851 = vmatprep.subr.mxu0 0.0
    %1852 = vmatpush1.msra.mxu0 0.0
    %1853 = vmatprep.subr.mxu0 0.0
    %1854 = vmatpush1.msra.mxu0 0.0
    %1855 = vmatprep.subr.mxu0 0.0
    %1856 = vmatpush1.msra.mxu0 0.0
    %1857 = vmatprep.subr.mxu0 0.0
    %1858 = vmatpush1.msra.mxu0 0.0
    %1859 = vmatprep.subr.mxu0 0.0
    %1860 = vmatpush1.msra.mxu0 0.0
    %1861 = vmatprep.subr.mxu0 0.0
    %1862 = vmatpush1.msra.mxu0 0.0
    %1863 = vmatprep.subr.mxu0 0.0
    %1864 = vmatpush1.msra.mxu0 0.0
    %1865 = vmatprep.subr.mxu0 0.0
    %1866 = vmatpush1.msra.mxu0 0.0
    %1867 = vmatprep.subr.mxu0 0.0
    %1868 = vmatpush1.msra.mxu0 %v1320
    %1869 = vmatprep.subr.mxu0 0.0
    %1870 = vmatpush1.msra.mxu0 %v1314
    %1871 = vmatprep.subr.mxu0 0.0
    %1872 = vmatpush2.msra.mxu0 0.0
    %1873 = vmatprep.subr.mxu0 0.0
    %1874 = vmatpush2.msra.mxu0 0.0
    %1875 = vmatprep.subr.mxu0 0.0
    %1876 = vmatpush2.msra.mxu0 0.0
    %1877 = vmatprep.subr.mxu0 0.0
    %1878 = vmatpush2.msra.mxu0 0.0
    %1879 = vmatprep.subr.mxu0 0.0
    %1880 = vmatpush2.msra.mxu0 0.0
    %1881 = vmatprep.subr.mxu0 0.0
    %1882 = vmatpush2.msra.mxu0 0.0
    %1883 = vmatprep.subr.mxu0 0.0
    %1884 = vmatpush2.msra.mxu0 0.0
    %1885 = vmatprep.subr.mxu0 0.0
    %1886 = vmatpush2.msra.mxu0 0.0
    %1887 = vmatprep.subr.mxu0 0.0
    %1888 = vmatpush2.msra.mxu0 0.0
    %1889 = vmatprep.subr.mxu0 0.0
    %1890 = vmatpush2.msra.mxu0 0.0
    %1891 = vmatprep.subr.mxu0 0.0
    %1892 = vmatpush2.msra.mxu0 0.0
    %1893 = vmatprep.subr.mxu0 0.0
    %1894 = vmatpush2.msra.mxu0 0.0
    %1895 = vmatprep.subr.mxu0 0.0
    %1896 = vmatpush2.msra.mxu0 0.0
    %1897 = vmatprep.subr.mxu0 0.0
    %1898 = vmatpush2.msra.mxu0 0.0
    %1899 = vmatprep.subr.mxu0 0.0
    %1900 = vmatpush2.msra.mxu0 0.0
    %1901 = vmatprep.subr.mxu0 0.0
    %1902 = vmatpush2.msra.mxu0 0.0
    %1903 = vmatprep.mubr.f32.mxu0 0.0
    %1904 = vmatmul.mubr.f32.gmra.mxu0 %v1834
    %v1905 = vpop.f32.mrf.mxu0
    %v1906 = vadd.f32 0.0, %v1905
    %v1907 = vpop.f32.mrf.mxu0
    %1908 = vmatprep.mubr.f32.mxu0 0.0
    %1909 = vmatmul.mubr.f32.gmra.mxu0 %v1837
    %v1910 = vpop.f32.mrf.mxu0
    %v1911 = vadd.f32 0.0, %v1910
    %v1912 = vpop.f32.mrf.mxu0
    %1913 = vdwg.mxu0
    %v1914 = vadd.f32 %v1712, %v1906
    %v1915 = vadd.f32 %v1717, %v1911
    %1916 = vrot.lane.b32.xlu0 %v1312, 104
    %v1917 = vpop.permute.xlu0 %1916
    %1918 = vrot.lane.b32.xlu0 %v1318, 104
    %v1919 = vpop.permute.xlu0 %1918
    %1920 = vrot.lane.b32.xlu0 %v1312, 72
    %v1921 = vpop.permute.xlu0 %1920
    %1922 = vrot.lane.b32.xlu0 %v1318, 72
    %v1923 = vpop.permute.xlu0 %1922
    %v1924 = vsel %vm152, %v1917, 0
    %v1926 = vsel %vm152, %v1919, 0
    %v1928 = vsel %vm152, %v1921, 0
    %v1930 = vsel %vm152, %v1923, 0
    %1932 = vmatprep.subr.mxu0 0.0
    %1933 = vmatpush1.xpose.msra.mxu0 0.0
    %1934 = vmatprep.subr.mxu0 0.0
    %1935 = vmatpush1.xpose.msra.mxu0 0.0
    %1936 = vmatprep.subr.mxu0 0.0
    %1937 = vmatpush1.xpose.msra.mxu0 0.0
    %1938 = vmatprep.subr.mxu0 0.0
    %1939 = vmatpush1.xpose.msra.mxu0 0.0
    %1940 = vmatprep.subr.mxu0 0.0
    %1941 = vmatpush1.xpose.msra.mxu0 0.0
    %1942 = vmatprep.subr.mxu0 0.0
    %1943 = vmatpush1.xpose.msra.mxu0 0.0
    %1944 = vmatprep.subr.mxu0 0.0
    %1945 = vmatpush1.xpose.msra.mxu0 0.0
    %1946 = vmatprep.subr.mxu0 0.0
    %1947 = vmatpush1.xpose.msra.mxu0 0.0
    %1948 = vmatprep.subr.mxu0 0.0
    %1949 = vmatpush1.xpose.msra.mxu0 0.0
    %1950 = vmatprep.subr.mxu0 0.0
    %1951 = vmatpush1.xpose.msra.mxu0 0.0
    %1952 = vmatprep.subr.mxu0 0.0
    %1953 = vmatpush1.xpose.msra.mxu0 0.0
    %1954 = vmatprep.subr.mxu0 0.0
    %1955 = vmatpush1.xpose.msra.mxu0 0.0
    %1956 = vmatprep.subr.mxu0 0.0
    %1957 = vmatpush1.xpose.msra.mxu0 0.0
    %1958 = vmatprep.subr.mxu0 0.0
    %1959 = vmatpush1.xpose.msra.mxu0 0.0
    %1960 = vmatprep.subr.mxu0 0.0
    %1961 = vmatpush1.xpose.msra.mxu0 %v1930
    %1962 = vmatprep.subr.mxu0 0.0
    %1963 = vmatpush1.xpose.msra.mxu0 %v1928
    %1964 = vmatprep.subr.mxu0 0.0
    %1965 = vmatpush2.xpose.msra.mxu0 0.0
    %1966 = vmatprep.subr.mxu0 0.0
    %1967 = vmatpush2.xpose.msra.mxu0 0.0
    %1968 = vmatprep.subr.mxu0 0.0
    %1969 = vmatpush2.xpose.msra.mxu0 0.0
    %1970 = vmatprep.subr.mxu0 0.0
    %1971 = vmatpush2.xpose.msra.mxu0 0.0
    %1972 = vmatprep.subr.mxu0 0.0
    %1973 = vmatpush2.xpose.msra.mxu0 0.0
    %1974 = vmatprep.subr.mxu0 0.0
    %1975 = vmatpush2.xpose.msra.mxu0 0.0
    %1976 = vmatprep.subr.mxu0 0.0
    %1977 = vmatpush2.xpose.msra.mxu0 0.0
    %1978 = vmatprep.subr.mxu0 0.0
    %1979 = vmatpush2.xpose.msra.mxu0 0.0
    %1980 = vmatprep.subr.mxu0 0.0
    %1981 = vmatpush2.xpose.msra.mxu0 0.0
    %1982 = vmatprep.subr.mxu0 0.0
    %1983 = vmatpush2.xpose.msra.mxu0 0.0
    %1984 = vmatprep.subr.mxu0 0.0
    %1985 = vmatpush2.xpose.msra.mxu0 0.0
    %1986 = vmatprep.subr.mxu0 0.0
    %1987 = vmatpush2.xpose.msra.mxu0 0.0
    %1988 = vmatprep.subr.mxu0 0.0
    %1989 = vmatpush2.xpose.msra.mxu0 0.0
    %1990 = vmatprep.subr.mxu0 0.0
    %1991 = vmatpush2.xpose.msra.mxu0 0.0
    %1992 = vmatprep.subr.mxu0 0.0
    %1993 = vmatpush2.xpose.msra.mxu0 0.0
    %1994 = vmatprep.subr.mxu0 0.0
    %1995 = vmatpush2.xpose.msra.mxu0 0.0
    %1996 = vmatprep.mubr.f32.mxu0 0.0
    %1997 = vmatmul.mubr.f32.gmra.mxu0 %v1924
    %v1998 = vpop.f32.mrf.mxu0
    %v1999 = vadd.f32 %v30, %v1998
    %v2000 = vpop.f32.mrf.mxu0
    %2001 = vmatprep.mubr.f32.mxu0 0.0
    %2002 = vmatmul.mubr.f32.gmra.mxu0 %v1926
    %v2003 = vpop.f32.mrf.mxu0
    %v2004 = vadd.f32 %v31, %v2003
    %v2005 = vpop.f32.mrf.mxu0
    %2006 = vdwg.mxu0
    %v2007 = vsel %vm236, %v1999, -inf
    %2008 = vmax.xlane.f32.xlu0 %v2007
    %v2009 = vpop.xlane.xlu0 %2008
    %v2010 = vsel %vm236, %v2004, -inf
    %2011 = vmax.xlane.f32.xlu0 %v2010
    %v2012 = vpop.xlane.xlu0 %2011
    %v2013 = vsub.f32 %v1999, %v2009
    %v2014 = vsub.f32 %v2004, %v2012
    %v2015 = vmul.f32 %v2013, 1.442695
    %v2016 = vpow.pop %v2015
    %v2017 = vmul.f32 %v2014, 1.442695
    %v2018 = vpow.pop %v2017
    %v2019 = vsel %vm236, %v2016, 0.0
    %2020 = vadd.xlane.f32.xlu0 %v2019
    %v2021 = vpop.xlane.xlu0 %2020
    %v2022 = vsel %vm236, %v2018, 0.0
    %2023 = vadd.xlane.f32.xlu0 %v2022
    %v2024 = vpop.xlane.xlu0 %2023
    %v2025 = vrcp.pop %v2021
    %v2026 = vrcp.pop %v2024
    %v2027 = vmul.f32 %v2016, %v2025
    %v2028 = vmul.f32 %v2018, %v2026
    %2031 = vrot.lane.b32.xlu0 %v1314, 96
    %v2032 = vpop.permute.xlu0 %2031
    %2033 = vrot.lane.b32.xlu0 %v1320, 96
    %v2034 = vpop.permute.xlu0 %2033
    %v2038 = vsel %vm236, %v2027, 0
    %v2041 = vsel %vm236, %v2028, 0
    %2043 = vmatprep.subr.mxu0 0.0
    %2044 = vmatpush1.msra.mxu0 0.0
    %2045 = vmatprep.subr.mxu0 0.0
    %2046 = vmatpush1.msra.mxu0 0.0
    %2047 = vmatprep.subr.mxu0 0.0
    %2048 = vmatpush1.msra.mxu0 0.0
    %2049 = vmatprep.subr.mxu0 0.0
    %2050 = vmatpush1.msra.mxu0 0.0
    %2051 = vmatprep.subr.mxu0 0.0
    %2052 = vmatpush1.msra.mxu0 0.0
    %2053 = vmatprep.subr.mxu0 0.0
    %2054 = vmatpush1.msra.mxu0 0.0
    %2055 = vmatprep.subr.mxu0 0.0
    %2056 = vmatpush1.msra.mxu0 0.0
    %2057 = vmatprep.subr.mxu0 0.0
    %2058 = vmatpush1.msra.mxu0 0.0
    %2059 = vmatprep.subr.mxu0 0.0
    %2060 = vmatpush1.msra.mxu0 0.0
    %2061 = vmatprep.subr.mxu0 0.0
    %2062 = vmatpush1.msra.mxu0 0.0
    %2063 = vmatprep.subr.mxu0 0.0
    %2064 = vmatpush1.msra.mxu0 0.0
    %2065 = vmatprep.subr.mxu0 0.0
    %2066 = vmatpush1.msra.mxu0 0.0
    %2067 = vmatprep.subr.mxu0 0.0
    %2068 = vmatpush1.msra.mxu0 0.0
    %2069 = vmatprep.subr.mxu0 0.0
    %2070 = vmatpush1.msra.mxu0 0.0
    %2071 = vmatprep.subr.mxu0 0.0
    %2072 = vmatpush1.msra.mxu0 %v2034
    %2073 = vmatprep.subr.mxu0 0.0
    %2074 = vmatpush1.msra.mxu0 %v2032
    %2075 = vmatprep.subr.mxu0 0.0
    %2076 = vmatpush2.msra.mxu0 0.0
    %2077 = vmatprep.subr.mxu0 0.0
    %2078 = vmatpush2.msra.mxu0 0.0
    %2079 = vmatprep.subr.mxu0 0.0
    %2080 = vmatpush2.msra.mxu0 0.0
    %2081 = vmatprep.subr.mxu0 0.0
    %2082 = vmatpush2.msra.mxu0 0.0
    %2083 = vmatprep.subr.mxu0 0.0
    %2084 = vmatpush2.msra.mxu0 0.0
    %2085 = vmatprep.subr.mxu0 0.0
    %2086 = vmatpush2.msra.mxu0 0.0
    %2087 = vmatprep.subr.mxu0 0.0
    %2088 = vmatpush2.msra.mxu0 0.0
    %2089 = vmatprep.subr.mxu0 0.0
    %2090 = vmatpush2.msra.mxu0 0.0
    %2091 = vmatprep.subr.mxu0 0.0
    %2092 = vmatpush2.msra.mxu0 0.0
    %2093 = vmatprep.subr.mxu0 0.0
    %2094 = vmatpush2.msra.mxu0 0.0
    %2095 = vmatprep.subr.mxu0 0.0
    %2096 = vmatpush2.msra.mxu0 0.0
    %2097 = vmatprep.subr.mxu0 0.0
    %2098 = vmatpush2.msra.mxu0 0.0
    %2099 = vmatprep.subr.mxu0 0.0
    %2100 = vmatpush2.msra.mxu0 0.0
    %2101 = vmatprep.subr.mxu0 0.0
    %2102 = vmatpush2.msra.mxu0 0.0
    %2103 = vmatprep.subr.mxu0 0.0
    %2104 = vmatpush2.msra.mxu0 0.0
    %2105 = vmatprep.subr.mxu0 0.0
    %2106 = vmatpush2.msra.mxu0 0.0
    %2107 = vmatprep.mubr.f32.mxu0 0.0
    %2108 = vmatmul.mubr.f32.gmra.mxu0 %v2038
    %v2109 = vpop.f32.mrf.mxu0
    %v2110 = vadd.f32 0.0, %v2109
    %v2111 = vpop.f32.mrf.mxu0
    %2112 = vmatprep.mubr.f32.mxu0 0.0
    %2113 = vmatmul.mubr.f32.gmra.mxu0 %v2041
    %v2114 = vpop.f32.mrf.mxu0
    %v2115 = vadd.f32 0.0, %v2114
    %v2116 = vpop.f32.mrf.mxu0
    %2117 = vdwg.mxu0
    %v2118 = vadd.f32 %v1914, %v2110
    %v2119 = vadd.f32 %v1915, %v2115
    %v2120 = vlaneseq
    %v2121 = vshrl.u32 %v2120, 7
    %v2122 = vsub.s32 1, %v2121
    %v2123 = vrot.slane %v1229, %v2122
    %v2124 = vadd.f32 %v2118, %v2123
    %v2125 = vadd.f32 %v2119, %v2123
    %v2126 = vadd.f32 %v1204, %v2124
    %v2127 = vadd.f32 %v1205, %v2125
    %v2128 = vsel %vm62, %v2126, 0.0
    %2129 = vadd.xlane.f32.xlu0 %v2128
    %v2130 = vpop.xlane.xlu0 %2129
    %v2131 = vsel %vm62, %v2127, 0.0
    %2132 = vadd.xlane.f32.xlu0 %v2131
    %v2133 = vpop.xlane.xlu0 %2132
    %v2134 = vmul.f32 %v2130, %v960
    %v2135 = vmul.f32 %v2133, %v960
    %v2136 = vsub.f32 %v2126, %v2134
    %v2137 = vsub.f32 %v2127, %v2135
    %v2138 = vmul.f32 %v2136, %v2136
    %v2139 = vmul.f32 %v2137, %v2137
    %v2140 = vsel %vm62, %v2138, 0.0
    %2141 = vadd.xlane.f32.xlu0 %v2140
    %v2142 = vpop.xlane.xlu0 %2141
    %v2143 = vsel %vm62, %v2139, 0.0
    %2144 = vadd.xlane.f32.xlu0 %v2143
    %v2145 = vpop.xlane.xlu0 %2144
    %v2146 = vmul.f32 %v2142, %v960
    %v2147 = vmul.f32 %v2145, %v960
    %v2148 = vadd.f32 %v2146, 1e-05
    %v2149 = vadd.f32 %v2147, 1e-05
    %v2150 = vrsqrt.pop %v2148
    %v2151 = vrsqrt.pop %v2149
    %v2152 = vmul.f32 %v2136, %v2150
    %v2153 = vmul.f32 %v2137, %v2151
    %v2154 = vlaneseq
    %v2155 = vshrl.u32 %v2154, 7
    %v2156 = vsub.s32 2, %v2155
    %v2157 = vrot.slane %v1229, %v2156
    %v2158 = vmul.f32 %v2152, %v2157
    %v2159 = vmul.f32 %v2153, %v2157
    %v2160 = vlaneseq
    %v2161 = vshrl.u32 %v2160, 7
    %v2162 = vsub.s32 3, %v2161
    %v2163 = vrot.slane %v1229, %v2162
    %v2164 = vadd.f32 %v2158, %v2163
    %v2165 = vadd.f32 %v2159, %v2163
    %v2166 = vlaneseq
    %v2167 = vshrl.u32 %v2166, 7
    %v2168 = vsub.s32 6, %v2167
    %v2169 = vrot.slane %v1229, %v2168
    %v2171 = vsel %vm62, %v2164, 0
    %v2174 = vsel %vm62, %v2165, 0
    %2176 = vmatprep.subr.mxu0 0.0
    %2177 = vmatpush1.msra.mxu0 0.0
    %2178 = vmatprep.subr.mxu0 0.0
    %2179 = vmatpush1.msra.mxu0 0.0
    %2180 = vmatprep.subr.mxu0 0.0
    %2181 = vmatpush1.msra.mxu0 0.0
    %2182 = vmatprep.subr.mxu0 0.0
    %2183 = vmatpush1.msra.mxu0 0.0
    %2184 = vmatprep.subr.mxu0 0.0
    %2185 = vmatpush1.msra.mxu0 0.0
    %2186 = vmatprep.subr.mxu0 0.0
    %2187 = vmatpush1.msra.mxu0 0.0
    %2188 = vmatprep.subr.mxu0 0.0
    %2189 = vmatpush1.msra.mxu0 0.0
    %2190 = vmatprep.subr.mxu0 0.0
    %2191 = vmatpush1.msra.mxu0 0.0
    %2192 = vmatprep.subr.mxu0 0.0
    %2193 = vmatpush1.msra.mxu0 0.0
    %2194 = vmatprep.subr.mxu0 0.0
    %2195 = vmatpush1.msra.mxu0 0.0
    %2196 = vmatprep.subr.mxu0 0.0
    %2197 = vmatpush1.msra.mxu0 0.0
    %2198 = vmatprep.subr.mxu0 0.0
    %2199 = vmatpush1.msra.mxu0 0.0
    %2200 = vmatprep.subr.mxu0 0.0
    %2201 = vmatpush1.msra.mxu0 %v1219
    %2202 = vmatprep.subr.mxu0 0.0
    %2203 = vmatpush1.msra.mxu0 %v1218
    %2204 = vmatprep.subr.mxu0 0.0
    %2205 = vmatpush1.msra.mxu0 %v1217
    %2206 = vmatprep.subr.mxu0 0.0
    %2207 = vmatpush1.msra.mxu0 %v1216
    %2208 = vmatprep.subr.mxu0 0.0
    %2209 = vmatpush2.msra.mxu0 0.0
    %2210 = vmatprep.subr.mxu0 0.0
    %2211 = vmatpush2.msra.mxu0 0.0
    %2212 = vmatprep.subr.mxu0 0.0
    %2213 = vmatpush2.msra.mxu0 0.0
    %2214 = vmatprep.subr.mxu0 0.0
    %2215 = vmatpush2.msra.mxu0 0.0
    %2216 = vmatprep.subr.mxu0 0.0
    %2217 = vmatpush2.msra.mxu0 0.0
    %2218 = vmatprep.subr.mxu0 0.0
    %2219 = vmatpush2.msra.mxu0 0.0
    %2220 = vmatprep.subr.mxu0 0.0
    %2221 = vmatpush2.msra.mxu0 0.0
    %2222 = vmatprep.subr.mxu0 0.0
    %2223 = vmatpush2.msra.mxu0 0.0
    %2224 = vmatprep.subr.mxu0 0.0
    %2225 = vmatpush2.msra.mxu0 0.0
    %2226 = vmatprep.subr.mxu0 0.0
    %2227 = vmatpush2.msra.mxu0 0.0
    %2228 = vmatprep.subr.mxu0 0.0
    %2229 = vmatpush2.msra.mxu0 0.0
    %2230 = vmatprep.subr.mxu0 0.0
    %2231 = vmatpush2.msra.mxu0 0.0
    %2232 = vmatprep.subr.mxu0 0.0
    %2233 = vmatpush2.msra.mxu0 0.0
    %2234 = vmatprep.subr.mxu0 0.0
    %2235 = vmatpush2.msra.mxu0 0.0
    %2236 = vmatprep.subr.mxu0 0.0
    %2237 = vmatpush2.msra.mxu0 0.0
    %2238 = vmatprep.subr.mxu0 0.0
    %2239 = vmatpush2.msra.mxu0 0.0
    %2240 = vmatprep.mubr.f32.mxu0 0.0
    %2241 = vmatmul.mubr.f32.gmra.mxu0 %v2171
    %v2242 = vpop.f32.mrf.mxu0
    %v2243 = vadd.f32 %v2169, %v2242
    %v2244 = vpop.f32.mrf.mxu0
    %2245 = vmatprep.mubr.f32.mxu0 0.0
    %2246 = vmatmul.mubr.f32.gmra.mxu0 %v2174
    %v2247 = vpop.f32.mrf.mxu0
    %v2248 = vadd.f32 %v2169, %v2247
    %v2249 = vpop.f32.mrf.mxu0
    %2250 = vdwg.mxu0
    %v2251 = vmax.f32 %v2243, 0.0
    %v2252 = vmax.f32 %v2248, 0.0
    %v2253 = vlaneseq
    %v2254 = vshrl.u32 %v2253, 7
    %v2255 = vsub.s32 7, %v2254
    %v2256 = vrot.slane %v1229, %v2255
    %v2258 = vsel %vm1084, %v2251, 0
    %v2261 = vsel %vm1084, %v2252, 0
    %2263 = vmatprep.subr.mxu0 0.0
    %2264 = vmatpush1.msra.mxu0 0.0
    %2265 = vmatprep.subr.mxu0 0.0
    %2266 = vmatpush1.msra.mxu0 0.0
    %2267 = vmatprep.subr.mxu0 0.0
    %2268 = vmatpush1.msra.mxu0 0.0
    %2269 = vmatprep.subr.mxu0 0.0
    %2270 = vmatpush1.msra.mxu0 0.0
    %2271 = vmatprep.subr.mxu0 0.0
    %2272 = vmatpush1.msra.mxu0 0.0
    %2273 = vmatprep.subr.mxu0 0.0
    %2274 = vmatpush1.msra.mxu0 0.0
    %2275 = vmatprep.subr.mxu0 0.0
    %2276 = vmatpush1.msra.mxu0 0.0
    %2277 = vmatprep.subr.mxu0 0.0
    %2278 = vmatpush1.msra.mxu0 0.0
    %2279 = vmatprep.subr.mxu0 0.0
    %2280 = vmatpush1.msra.mxu0 %v1227
    %2281 = vmatprep.subr.mxu0 0.0
    %2282 = vmatpush1.msra.mxu0 %v1226
    %2283 = vmatprep.subr.mxu0 0.0
    %2284 = vmatpush1.msra.mxu0 %v1225
    %2285 = vmatprep.subr.mxu0 0.0
    %2286 = vmatpush1.msra.mxu0 %v1224
    %2287 = vmatprep.subr.mxu0 0.0
    %2288 = vmatpush1.msra.mxu0 %v1223
    %2289 = vmatprep.subr.mxu0 0.0
    %2290 = vmatpush1.msra.mxu0 %v1222
    %2291 = vmatprep.subr.mxu0 0.0
    %2292 = vmatpush1.msra.mxu0 %v1221
    %2293 = vmatprep.subr.mxu0 0.0
    %2294 = vmatpush1.msra.mxu0 %v1220
    %2295 = vmatprep.subr.mxu0 0.0
    %2296 = vmatpush2.msra.mxu0 0.0
    %2297 = vmatprep.subr.mxu0 0.0
    %2298 = vmatpush2.msra.mxu0 0.0
    %2299 = vmatprep.subr.mxu0 0.0
    %2300 = vmatpush2.msra.mxu0 0.0
    %2301 = vmatprep.subr.mxu0 0.0
    %2302 = vmatpush2.msra.mxu0 0.0
    %2303 = vmatprep.subr.mxu0 0.0
    %2304 = vmatpush2.msra.mxu0 0.0
    %2305 = vmatprep.subr.mxu0 0.0
    %2306 = vmatpush2.msra.mxu0 0.0
    %2307 = vmatprep.subr.mxu0 0.0
    %2308 = vmatpush2.msra.mxu0 0.0
    %2309 = vmatprep.subr.mxu0 0.0
    %2310 = vmatpush2.msra.mxu0 0.0
    %2311 = vmatprep.subr.mxu0 0.0
    %2312 = vmatpush2.msra.mxu0 0.0
    %2313 = vmatprep.subr.mxu0 0.0
    %2314 = vmatpush2.msra.mxu0 0.0
    %2315 = vmatprep.subr.mxu0 0.0
    %2316 = vmatpush2.msra.mxu0 0.0
    %2317 = vmatprep.subr.mxu0 0.0
    %2318 = vmatpush2.msra.mxu0 0.0
    %2319 = vmatprep.subr.mxu0 0.0
    %2320 = vmatpush2.msra.mxu0 0.0
    %2321 = vmatprep.subr.mxu0 0.0
    %2322 = vmatpush2.msra.mxu0 0.0
    %2323 = vmatprep.subr.mxu0 0.0
    %2324 = vmatpush2.msra.mxu0 0.0
    %2325 = vmatprep.subr.mxu0 0.0
    %2326 = vmatpush2.msra.mxu0 0.0
    %2327 = vmatprep.mubr.f32.mxu0 0.0
    %2328 = vmatmul.mubr.f32.gmra.mxu0 %v2258
    %v2329 = vpop.f32.mrf.mxu0
    %v2330 = vadd.f32 %v2256, %v2329
    %v2331 = vpop.f32.mrf.mxu0
    %2332 = vmatprep.mubr.f32.mxu0 0.0
    %2333 = vmatmul.mubr.f32.gmra.mxu0 %v2261
    %v2334 = vpop.f32.mrf.mxu0
    %v2335 = vadd.f32 %v2256, %v2334
    %v2336 = vpop.f32.mrf.mxu0
    %2337 = vdwg.mxu0
    %v2338 = vadd.f32 %v2164, %v2330
    %v2339 = vadd.f32 %v2165, %v2335
    %v2340 = vsel %vm62, %v2338, 0.0
    %2341 = vadd.xlane.f32.xlu0 %v2340
    %v2342 = vpop.xlane.xlu0 %2341
    %v2343 = vsel %vm62, %v2339, 0.0
    %2344 = vadd.xlane.f32.xlu0 %v2343
    %v2345 = vpop.xlane.xlu0 %2344
    %v2346 = vmul.f32 %v2342, %v960
    %v2347 = vmul.f32 %v2345, %v960
    %v2348 = vsub.f32 %v2338, %v2346
    %v2349 = vsub.f32 %v2339, %v2347
    %v2350 = vmul.f32 %v2348, %v2348
    %v2351 = vmul.f32 %v2349, %v2349
    %v2352 = vsel %vm62, %v2350, 0.0
    %2353 = vadd.xlane.f32.xlu0 %v2352
    %v2354 = vpop.xlane.xlu0 %2353
    %v2355 = vsel %vm62, %v2351, 0.0
    %2356 = vadd.xlane.f32.xlu0 %v2355
    %v2357 = vpop.xlane.xlu0 %2356
    %v2358 = vmul.f32 %v2354, %v960
    %v2359 = vmul.f32 %v2357, %v960
    %v2360 = vadd.f32 %v2358, 1e-05
    %v2361 = vadd.f32 %v2359, 1e-05
    %v2362 = vrsqrt.pop %v2360
    %v2363 = vrsqrt.pop %v2361
    %v2364 = vmul.f32 %v2348, %v2362
    %v2365 = vmul.f32 %v2349, %v2363
    %v2366 = vlaneseq
    %v2367 = vshrl.u32 %v2366, 7
    %v2368 = vsub.s32 4, %v2367
    %v2369 = vrot.slane %v1229, %v2368
    %v2370 = vmul.f32 %v2364, %v2369
    %v2371 = vmul.f32 %v2365, %v2369
    %v2372 = vlaneseq
    %v2373 = vshrl.u32 %v2372, 7
    %v2374 = vsub.s32 5, %v2373
    %v2375 = vrot.slane %v1229, %v2374
    %v2376 = vadd.f32 %v2370, %v2375
    %v2377 = vadd.f32 %v2371, %v2375
    %2378 = vst.msk [vmem:[#allocation2] sm:$0xff] %vm62, %v2376
    %2379 = vst.msk [vmem:[#allocation2 + $0x8] sm:$0xff] %vm62, %v2377
    // Predicated region
    $region18: #{transformer_encoder.1} parent=1 // pred_check
      _
    $region19: #{transformer_encoder.1} parent=1 // pred_check_branch
      %2381 = sbr.rel (0) target = $region21
    $region20: #{transformer_encoder.1} parent=1 // pred_region
      %s2383 = ssub.s32 256, 256
      %2384 = vsyncadd [#allocation3], %s2383
      %s2385 = sshll.u32 [#allocation2], 4
      %s2386 = int_to_ptr.vmem [resolvable:$true] %s2385
      %2391 = dma.vmem_to_hbm [thread:$0]  %s2386, 256, %s4, [#allocation3], 128, 128, 8
    $region21: #{transformer_encoder.1} parent=1 // pred_fallthru
      _
    // Predicated region
    $region22: #{transformer_encoder.1} parent=1 // pred_check
      _
    $region23: #{transformer_encoder.1} parent=1 // pred_check_branch
      %2393 = sbr.rel (0) target = $region25
    $region24: #{transformer_encoder.1} parent=1 // pred_region
      %2394 = dma.done [#allocation3], 256
    $region25: #{transformer_encoder.1} parent=1 // pred_fallthru
      _
    %2395 = vsyncpa [#allocation3], 1

</llo_original>
